<compile_context>
chip_gen: v5e
topology: v5e:2x2
jax: 0.10.0
libtpu: 0.0.40
codegen_flags: <defaults>
</compile_context>

<pallas_src>
import functools

import numpy as np
import jax
import jax.numpy as jnp
from jax.experimental import pallas as pl
from jax.experimental.pallas import tpu as pltpu


def _round_up(v, m):
    return (v + m - 1) // m * m


def _vmem_cap_bytes():
    """~3/4 of physical VMEM: ~48 MiB on v7x (64 MiB), ~96 MiB on v5e/v6e (128 MiB)."""
    phys = None
    try:
        phys = getattr(pltpu.get_tpu_info(), "vmem_capacity_bytes", None)
    except Exception:
        phys = None
    if not phys:
        phys = 128 * 2**20
    return (int(phys) * 3) // 4


def _cconv2d_kernel(x_ref, w_ref, b_ref, o_ref, *, TH, TW, MT, KH, KW, sd, fold):
    """One (batch, TH output rows) tile of the fused complex Conv2d.

    x_ref: (1, Dk, C2, Tk)          bf16 padded input; time (lanes) is stride-1
    w_ref: fold: (Cout2p, KH*KW*C2) bf16 tap-folded combined complex weight
           else: (KH, KW, Cout2p, C2) bf16 per-tap combined complex weight
    b_ref: (Cout2p, 1)              f32 combined bias
    o_ref: (1, TH, Cout2p, WOp)     output tile (bf16/f32), WOp % 128 == 0
    """
    h = pl.program_id(1)
    cout2 = o_ref.shape[2]
    wop = o_ref.shape[3]
    n_w = wop // TW
    n_m = cout2 // MT

    # Bias broadcast hoisted out of all loops (JAX does not CSE broadcasts); it
    # doubles as the accumulator init, so bias is added exactly once.
    bias = [jnp.broadcast_to(b_ref[m * MT:(m + 1) * MT, :], (MT, TW))
            for m in range(n_m)]

    row0 = h * (TH * sd)
    for r in range(TH):                               # HO is tiled by the grid
        in_row = row0 + r * sd                        # dynamic outer-dim offset
        if fold:
            # All KH*KW taps folded into one contraction: lane-shifted full-width
            # row slices concatenated along K (done once per row, reused by every
            # width/M chunk), so each chunk is a single (MT,K)@(K,TW) MXU matmul
            # instead of KH*KW tiny-K matmuls plus an f32 add chain.
            rhs = jnp.concatenate(
                [x_ref[0, in_row + kh, :, kw:kw + wop]
                 for kh in range(KH) for kw in range(KW)], axis=0)
        for wb in range(n_w):
            w0 = wb * TW
            for m in range(n_m):
                m0 = m * MT
                if fold:
                    acc = bias[m] + jnp.dot(w_ref[m0:m0 + MT, :],
                                            rhs[:, w0:w0 + TW],
                                            preferred_element_type=jnp.float32)
                else:
                    acc = bias[m]
                    for kh in range(KH):
                        for kw in range(KW):
                            xs = x_ref[0, in_row + kh, :, w0 + kw:w0 + kw + TW]
                            acc = acc + jnp.dot(w_ref[kh, kw, m0:m0 + MT, :], xs,
                                                preferred_element_type=jnp.float32)
                # Dense store: one contiguous (MT, TW) sublane x lane tile.
                o_ref[0, r, m0:m0 + MT, w0:w0 + TW] = acc.astype(o_ref.dtype)


def complex_conv2d(x, w_real, w_imag, b_real, b_imag, *,
                   stride=(1, 1), padding=(0, 0), causal=True,
                   kernel_out_dtype=jnp.bfloat16):
    """x: (N, 2*Cin, D, T) NCHW, real channels first then imag (complex_axis=1).
    w_real/w_imag: (Cout, Cin, KH, KW) (PyTorch Conv2d weight layout).
    b_real/b_imag: (Cout,).  Returns (N, 2*Cout, HO, WO) float32 (NCHW).
    kernel_out_dtype controls the kernel's HBM writeback precision (bf16 halves
    writeback; MXU accumulation is always f32)."""
    N, C2, D, T = x.shape
    Cout, Cin, KH, KW = w_real.shape
    assert C2 == 2 * Cin
    Cout2 = 2 * Cout
    sd, st = stride
    pd, pt = padding

    # time padding from forward() (causal => left-only), freq padding from Conv2d
    tl, tr = (pt, 0) if (pt != 0 and causal) else (pt, pt)
    Dp, Tp = D + 2 * pd, T + tl + tr
    HO = (Dp - KH) // sd + 1
    WO = (Tp - KW) // st + 1

    TH = 8                                            # output rows per grid step
    HOp = _round_up(HO, TH)
    WO1 = Tp - KW + 1                                 # stride-1 time output width
    WOp = _round_up(WO1, 128)                         # lane-dense output width
    Cout2p = _round_up(Cout2, 16)                     # dense bf16 sublane stores
    Dk = max((HOp - 1) * sd + KH, Dp)                 # input rows the kernel reads
    Tk = _round_up(WOp + KW - 1, 128)                 # full 128-lane DMA rows (>=Tp)

    # width chunk (lanes of one accumulator); multiple of 128 (or == WOp)
    if WOp <= 512:
        TW = WOp
    elif WOp % 512 == 0:
        TW = 512
    elif WOp % 256 == 0:
        TW = 256
    else:
        TW = 128
    # M (output-channel) chunk: bound each f32 accumulator to <= ~32 vregs
    MT = Cout2p
    if Cout2p * TW * 4 > 128 * 1024:
        for cand in (128, 64, 32, 16):
            if Cout2p % cand == 0 and cand * TW * 4 <= 128 * 1024:
                MT = cand
                break

    # Tap folding raises MXU contraction depth from C2 to KH*KW*C2; only worth
    # it for small channel counts (wide layers already fill the MXU K dim).
    fold = C2 < 128

    # Wrapper glue: one layout change + bf16 cast, one fused pad covering conv
    # padding, causal time padding and the grid/lane round-up.
    # TODO(synk): when chaining DCCRN layers keep activations in (N, D, C2, T)
    # so this transpose and the output NCHW reorder disappear between layers.
    xt = jnp.transpose(x, (0, 2, 1, 3)).astype(jnp.bfloat16)      # (N, D, C2, T)
    xp = jnp.pad(xt, ((0, 0), (pd, Dk - D - pd), (0, 0), (tl, Tk - T - tl)))

    # combined complex weight, per-tap block [[Wr, -Wi], [Wi, Wr]] so
    # [xr; xi] -> [Wr xr - Wi xi ; Wi xr + Wr xi]; zero-pad Cout2 -> Cout2p.
    wr = jnp.transpose(w_real, (2, 3, 0, 1))
    wi = jnp.transpose(w_imag, (2, 3, 0, 1))
    w_comb = jnp.concatenate(
        [jnp.concatenate([wr, -wi], axis=-1),
         jnp.concatenate([wi, wr], axis=-1)], axis=-2)           # (KH,KW,Cout2,C2)
    b_vec = jnp.concatenate([b_real - b_imag, b_imag + b_real])
    if Cout2p != Cout2:
        w_comb = jnp.pad(w_comb, ((0, 0), (0, 0), (0, Cout2p - Cout2), (0, 0)))
        b_vec = jnp.pad(b_vec, (0, Cout2p - Cout2))
    if fold:
        # (Cout2p, KH*KW*C2): K ordered (kh, kw, c) to match the kernel's concat.
        w_k = jnp.transpose(w_comb, (2, 0, 1, 3)).reshape(Cout2p, KH * KW * C2)
        w_spec = pl.BlockSpec((Cout2p, KH * KW * C2), lambda n, h: (0, 0))
    else:
        w_k = w_comb
        w_spec = pl.BlockSpec((KH, KW, Cout2p, C2), lambda n, h: (0, 0, 0, 0))
    w_k = w_k.astype(jnp.bfloat16)
    b_comb = b_vec.astype(jnp.float32)[:, None]                  # (Cout2p, 1)

    # VMEM budget: double-buffered blocks, accounting for Mosaic tile padding
    # (bf16 (16,128) tiles, f32 (8,128) tiles); capped per TPU generation.
    out_itm = jnp.dtype(kernel_out_dtype).itemsize
    slab_b = Dk * _round_up(C2, 16) * Tk * 2
    if fold:
        w_b = Cout2p * _round_up(KH * KW * C2, 128) * 2
    else:
        w_b = KH * KW * Cout2p * _round_up(C2, 128) * 2
    bias_b = _round_up(Cout2p, 8) * 128 * 4
    out_b = TH * Cout2p * WOp * out_itm
    vmem_need = 2 * (slab_b + w_b + bias_b + out_b)
    vmem_limit = int(min(_vmem_cap_bytes(), max(vmem_need + (2 << 20), 8 << 20)))
    # TODO(synk): for very long T / deep layers where vmem_need exceeds the v7x
    # cap, tile the time axis in the grid with a (KW-1)-column halo via manual
    # make_async_copy and single-buffer the resident input slab.

    kernel = functools.partial(_cconv2d_kernel, TH=TH, TW=TW, MT=MT,
                               KH=KH, KW=KW, sd=sd, fold=fold)
    out = pl.pallas_call(
        kernel,
        out_shape=jax.ShapeDtypeStruct((N, HOp, Cout2p, WOp), kernel_out_dtype),
        grid_spec=pltpu.PrefetchScalarGridSpec(
            num_scalar_prefetch=0,
            grid=(N, HOp // TH),      # N leads so megacore sharding splits batches
            in_specs=[
                # full padded slab per batch element; h-invariant block index so
                # it is DMA'd once per n and stays resident across all h steps.
                pl.BlockSpec((1, Dk, C2, Tk), lambda n, h: (n, 0, 0, 0)),
                w_spec,
                pl.BlockSpec((Cout2p, 1), lambda n, h: (0, 0)),
            ],
            out_specs=pl.BlockSpec((1, TH, Cout2p, WOp), lambda n, h: (n, h, 0, 0)),
        ),
        compiler_params=pltpu.CompilerParams(
            dimension_semantics=("parallel", "parallel"),
            vmem_limit_bytes=vmem_limit),
    )(xp, w_k, b_comb)

    # (N, HOp, Cout2p, WOp) -> NCHW; strip channel/grid/lane padding; subsample
    # time when stride[1] > 1.
    # TODO(synk): time stride > 1 is computed at stride 1 and subsampled (DCCRN
    # uses stride (2,1) so this path is cold); groups>1 / dilation>1 unsupported.
    out = jnp.transpose(out, (0, 2, 1, 3))
    out = out[:, :Cout2, :HO, :(WO - 1) * st + 1:st]
    return out.astype(jnp.float32)


# ---------------------------------------------------------------------------
# numpy reference with exact PyTorch Conv2d / ComplexConv2d.forward semantics
# ---------------------------------------------------------------------------
def _ref_conv2d(xn, W, b, sd, st, pd):
    Nn, Ci, Dn, Tn = xn.shape
    Co, _, kh, kw = W.shape
    xpad = np.pad(xn, ((0, 0), (0, 0), (pd, pd), (0, 0)))
    Ho = (Dn + 2 * pd - kh) // sd + 1
    Wo = (Tn - kw) // st + 1
    o = np.zeros((Nn, Co, Ho, Wo), np.float32)
    for ho in range(Ho):
        for wo in range(Wo):
            patch = xpad[:, :, ho * sd:ho * sd + kh, wo * st:wo * st + kw]
            o[:, :, ho, wo] = np.tensordot(patch, W, axes=([1, 2, 3], [1, 2, 3]))
    return o + b[None, :, None, None]


def _ref_complex_conv2d(xn, wr, wi, br, bi, stride, padding, causal):
    sd, st = stride
    pd, pt = padding
    if pt != 0 and causal:
        xn = np.pad(xn, ((0, 0), (0, 0), (0, 0), (pt, 0)))
    else:
        xn = np.pad(xn, ((0, 0), (0, 0), (0, 0), (pt, pt)))
    Ci = xn.shape[1] // 2
    xr, xi = xn[:, :Ci], xn[:, Ci:]
    r2r = _ref_conv2d(xr, wr, br, sd, st, pd)
    i2i = _ref_conv2d(xi, wi, bi, sd, st, pd)
    r2i = _ref_conv2d(xr, wi, bi, sd, st, pd)
    i2r = _ref_conv2d(xi, wr, br, sd, st, pd)
    return np.concatenate([r2r - i2i, r2i + i2r], axis=1)


if __name__ == "__main__":
    key = jax.random.PRNGKey(0)
    N = 2
    cases = [
        # DCCRN-style encoder conv: kernel (5,2), stride (2,1), causal time pad
        dict(in_ch=8, out_ch=8, ksize=(5, 2), stride=(2, 1), padding=(2, 1),
             causal=True, D=16, T=12),
        # non-causal, time-strided, non-multiple-of-16 output channels
        dict(in_ch=8, out_ch=12, ksize=(3, 3), stride=(1, 2), padding=(1, 2),
             causal=False, D=9, T=10),
        # wide-channel layer: exercises the per-tap (no tap folding) path
        dict(in_ch=256, out_ch=32, ksize=(3, 2), stride=(2, 1), padding=(1, 1),
             causal=True, D=8, T=8),
    ]

    for i, cfg in enumerate(cases):
        key, k1, k2, k3, k4, k5 = jax.random.split(key, 6)
        Cin, Cout = cfg["in_ch"] // 2, cfg["out_ch"] // 2
        KH, KW = cfg["ksize"]
        x = jax.random.normal(k1, (N, cfg["in_ch"], cfg["D"], cfg["T"]), jnp.float32)
        # deterministic init mirroring nn.init.normal_(std=0.05); nonzero biases to
        # exercise the bias path (module inits biases to 0, but they train).
        w_real = 0.05 * jax.random.normal(k2, (Cout, Cin, KH, KW), jnp.float32)
        w_imag = 0.05 * jax.random.normal(k3, (Cout, Cin, KH, KW), jnp.float32)
        b_real = 0.1 * jax.random.normal(k4, (Cout,), jnp.float32)
        b_imag = 0.1 * jax.random.normal(k5, (Cout,), jnp.float32)

        fn = jax.jit(functools.partial(
            complex_conv2d, stride=cfg["stride"], padding=cfg["padding"],
            causal=cfg["causal"]))
        out = jax.block_until_ready(fn(x, w_real, w_imag, b_real, b_imag))

        ref = _ref_complex_conv2d(np.asarray(x), np.asarray(w_real),
                                  np.asarray(w_imag), np.asarray(b_real),
                                  np.asarray(b_imag), cfg["stride"],
                                  cfg["padding"], cfg["causal"])
        assert out.shape == ref.shape, (i, out.shape, ref.shape)
        err = float(np.max(np.abs(np.asarray(out) - ref)))
        assert np.allclose(np.asarray(out), ref, atol=3e-2, rtol=3e-2), (i, err)

    print("KERNEL_OK")
</pallas_src>

<mosaic_0001>
module attributes {stable_mosaic.version = 11 : i64} {
  func.func @_cconv2d_kernel(%arg0: i32, %arg1: i32, %arg2: memref<1x20x8x256xbf16, #tpu.memory_space<vmem>>, %arg3: memref<16x80xbf16, #tpu.memory_space<vmem>>, %arg4: memref<16x1xf32, #tpu.memory_space<vmem>>, %arg5: memref<1x8x16x128xbf16, #tpu.memory_space<vmem>>) attributes {dimension_semantics = [#tpu.dimension_semantics<parallel>, #tpu.dimension_semantics<parallel>], iteration_bounds = array<i64: 2, 1>, scalar_prefetch = 0 : i64, scratch_operands = 0 : i64, tpu.core_type = #tpu.core_type<tc>, window_params = [{transform_indices = @transform_0, window_bounds = array<i64: 1, 20, 8, 256>}, {pipeline_mode = #tpu.pipeline_mode<synchronous>, transform_indices = @transform_1, window_bounds = array<i64: 16, 80>}, {pipeline_mode = #tpu.pipeline_mode<synchronous>, transform_indices = @transform_2, window_bounds = array<i64: 16, 1>}, {transform_indices = @transform_3, window_bounds = array<i64: 1, 8, 16, 128>}]} {
    %c0 = arith.constant 0 : index
    %c0_0 = arith.constant 0 : index
    %0 = vector.load %arg4[%c0, %c0_0] : memref<16x1xf32, #tpu.memory_space<vmem>>, vector<16x1xf32>
    %1 = vector.shape_cast %0 : vector<16x1xf32> to vector<16x1xf32>
    %2 = vector.broadcast %1 : vector<16x1xf32> to vector<16x128xf32>
    %c16_i32 = arith.constant 16 : i32
    %3 = arith.muli %arg1, %c16_i32 : i32
    %c0_i32 = arith.constant 0 : i32
    %4 = arith.addi %3, %c0_i32 : i32
    %c0_i32_1 = arith.constant 0 : i32
    %5 = arith.addi %4, %c0_i32_1 : i32
    %c0_2 = arith.constant 0 : index
    %6 = arith.index_cast %5 : i32 to index
    %c0_3 = arith.constant 0 : index
    %c0_4 = arith.constant 0 : index
    %7 = vector.load %arg2[%c0_2, %6, %c0_3, %c0_4] : memref<1x20x8x256xbf16, #tpu.memory_space<vmem>>, vector<1x1x8x128xbf16>
    %8 = vector.shape_cast %7 : vector<1x1x8x128xbf16> to vector<8x128xbf16>
    %c0_i32_5 = arith.constant 0 : i32
    %9 = arith.addi %4, %c0_i32_5 : i32
    %c0_6 = arith.constant 0 : index
    %10 = arith.index_cast %9 : i32 to index
    %c0_7 = arith.constant 0 : index
    %c1 = arith.constant 1 : index
    %11 = vector.load %arg2[%c0_6, %10, %c0_7, %c1] : memref<1x20x8x256xbf16, #tpu.memory_space<vmem>>, vector<1x1x8x128xbf16>
    %12 = vector.shape_cast %11 : vector<1x1x8x128xbf16> to vector<8x128xbf16>
    %c1_i32 = arith.constant 1 : i32
    %13 = arith.addi %4, %c1_i32 : i32
    %c0_8 = arith.constant 0 : index
    %14 = arith.index_cast %13 : i32 to index
    %c0_9 = arith.constant 0 : index
    %c0_10 = arith.constant 0 : index
    %15 = vector.load %arg2[%c0_8, %14, %c0_9, %c0_10] : memref<1x20x8x256xbf16, #tpu.memory_space<vmem>>, vector<1x1x8x128xbf16>
    %16 = vector.shape_cast %15 : vector<1x1x8x128xbf16> to vector<8x128xbf16>
    %c1_i32_11 = arith.constant 1 : i32
    %17 = arith.addi %4, %c1_i32_11 : i32
    %c0_12 = arith.constant 0 : index
    %18 = arith.index_cast %17 : i32 to index
    %c0_13 = arith.constant 0 : index
    %c1_14 = arith.constant 1 : index
    %19 = vector.load %arg2[%c0_12, %18, %c0_13, %c1_14] : memref<1x20x8x256xbf16, #tpu.memory_space<vmem>>, vector<1x1x8x128xbf16>
    %20 = vector.shape_cast %19 : vector<1x1x8x128xbf16> to vector<8x128xbf16>
    %c2_i32 = arith.constant 2 : i32
    %21 = arith.addi %4, %c2_i32 : i32
    %c0_15 = arith.constant 0 : index
    %22 = arith.index_cast %21 : i32 to index
    %c0_16 = arith.constant 0 : index
    %c0_17 = arith.constant 0 : index
    %23 = vector.load %arg2[%c0_15, %22, %c0_16, %c0_17] : memref<1x20x8x256xbf16, #tpu.memory_space<vmem>>, vector<1x1x8x128xbf16>
    %24 = vector.shape_cast %23 : vector<1x1x8x128xbf16> to vector<8x128xbf16>
    %c2_i32_18 = arith.constant 2 : i32
    %25 = arith.addi %4, %c2_i32_18 : i32
    %c0_19 = arith.constant 0 : index
    %26 = arith.index_cast %25 : i32 to index
    %c0_20 = arith.constant 0 : index
    %c1_21 = arith.constant 1 : index
    %27 = vector.load %arg2[%c0_19, %26, %c0_20, %c1_21] : memref<1x20x8x256xbf16, #tpu.memory_space<vmem>>, vector<1x1x8x128xbf16>
    %28 = vector.shape_cast %27 : vector<1x1x8x128xbf16> to vector<8x128xbf16>
    %c3_i32 = arith.constant 3 : i32
    %29 = arith.addi %4, %c3_i32 : i32
    %c0_22 = arith.constant 0 : index
    %30 = arith.index_cast %29 : i32 to index
    %c0_23 = arith.constant 0 : index
    %c0_24 = arith.constant 0 : index
    %31 = vector.load %arg2[%c0_22, %30, %c0_23, %c0_24] : memref<1x20x8x256xbf16, #tpu.memory_space<vmem>>, vector<1x1x8x128xbf16>
    %32 = vector.shape_cast %31 : vector<1x1x8x128xbf16> to vector<8x128xbf16>
    %c3_i32_25 = arith.constant 3 : i32
    %33 = arith.addi %4, %c3_i32_25 : i32
    %c0_26 = arith.constant 0 : index
    %34 = arith.index_cast %33 : i32 to index
    %c0_27 = arith.constant 0 : index
    %c1_28 = arith.constant 1 : index
    %35 = vector.load %arg2[%c0_26, %34, %c0_27, %c1_28] : memref<1x20x8x256xbf16, #tpu.memory_space<vmem>>, vector<1x1x8x128xbf16>
    %36 = vector.shape_cast %35 : vector<1x1x8x128xbf16> to vector<8x128xbf16>
    %c4_i32 = arith.constant 4 : i32
    %37 = arith.addi %4, %c4_i32 : i32
    %c0_29 = arith.constant 0 : index
    %38 = arith.index_cast %37 : i32 to index
    %c0_30 = arith.constant 0 : index
    %c0_31 = arith.constant 0 : index
    %39 = vector.load %arg2[%c0_29, %38, %c0_30, %c0_31] : memref<1x20x8x256xbf16, #tpu.memory_space<vmem>>, vector<1x1x8x128xbf16>
    %40 = vector.shape_cast %39 : vector<1x1x8x128xbf16> to vector<8x128xbf16>
    %c4_i32_32 = arith.constant 4 : i32
    %41 = arith.addi %4, %c4_i32_32 : i32
    %c0_33 = arith.constant 0 : index
    %42 = arith.index_cast %41 : i32 to index
    %c0_34 = arith.constant 0 : index
    %c1_35 = arith.constant 1 : index
    %43 = vector.load %arg2[%c0_33, %42, %c0_34, %c1_35] : memref<1x20x8x256xbf16, #tpu.memory_space<vmem>>, vector<1x1x8x128xbf16>
    %44 = vector.shape_cast %43 : vector<1x1x8x128xbf16> to vector<8x128xbf16>
    %45 = tpu.concatenate %8, %12, %16, %20, %24, %28, %32, %36, %40, %44 in 0 : vector<8x128xbf16>, vector<8x128xbf16>, vector<8x128xbf16>, vector<8x128xbf16>, vector<8x128xbf16>, vector<8x128xbf16>, vector<8x128xbf16>, vector<8x128xbf16>, vector<8x128xbf16>, vector<8x128xbf16> -> vector<80x128xbf16>
    %c0_36 = arith.constant 0 : index
    %c0_37 = arith.constant 0 : index
    %46 = vector.load %arg3[%c0_36, %c0_37] : memref<16x80xbf16, #tpu.memory_space<vmem>>, vector<16x80xbf16>
    %cst = arith.constant dense<0.000000e+00> : vector<16x128xf32>
    %47 = tpu.matmul %46, %45, %cst {dimension_numbers = #tpu.dot_dimension_numbers<[1], [0], [0], [1], [0, 0, 1, 1], [], []>} : vector<16x80xbf16>, vector<80x128xbf16>, vector<16x128xf32> -> vector<16x128xf32>
    %48 = arith.addf %2, %47 : vector<16x128xf32>
    %49 = arith.truncf %48 : vector<16x128xf32> to vector<16x128xbf16>
    %c0_38 = arith.constant 0 : index
    %c0_39 = arith.constant 0 : index
    %c0_40 = arith.constant 0 : index
    %c0_41 = arith.constant 0 : index
    %50 = vector.load %arg5[%c0_38, %c0_39, %c0_40, %c0_41] : memref<1x8x16x128xbf16, #tpu.memory_space<vmem>>, vector<1x1x16x128xbf16>
    %51 = vector.shape_cast %50 : vector<1x1x16x128xbf16> to vector<16x128xbf16>
    %52 = vector.shape_cast %49 : vector<16x128xbf16> to vector<1x1x16x128xbf16>
    tpu.vector_store %arg5[%c0_38, %c0_39, %c0_40, %c0_41], %52 {strides = array<i32>} : memref<1x8x16x128xbf16, #tpu.memory_space<vmem>>, vector<1x1x16x128xbf16>,
    %c2_i32_42 = arith.constant 2 : i32
    %53 = arith.addi %3, %c2_i32_42 : i32
    %c0_i32_43 = arith.constant 0 : i32
    %54 = arith.addi %53, %c0_i32_43 : i32
    %c0_44 = arith.constant 0 : index
    %55 = arith.index_cast %54 : i32 to index
    %c0_45 = arith.constant 0 : index
    %c0_46 = arith.constant 0 : index
    %56 = vector.load %arg2[%c0_44, %55, %c0_45, %c0_46] : memref<1x20x8x256xbf16, #tpu.memory_space<vmem>>, vector<1x1x8x128xbf16>
    %57 = vector.shape_cast %56 : vector<1x1x8x128xbf16> to vector<8x128xbf16>
    %c0_i32_47 = arith.constant 0 : i32
    %58 = arith.addi %53, %c0_i32_47 : i32
    %c0_48 = arith.constant 0 : index
    %59 = arith.index_cast %58 : i32 to index
    %c0_49 = arith.constant 0 : index
    %c1_50 = arith.constant 1 : index
    %60 = vector.load %arg2[%c0_48, %59, %c0_49, %c1_50] : memref<1x20x8x256xbf16, #tpu.memory_space<vmem>>, vector<1x1x8x128xbf16>
    %61 = vector.shape_cast %60 : vector<1x1x8x128xbf16> to vector<8x128xbf16>
    %c1_i32_51 = arith.constant 1 : i32
    %62 = arith.addi %53, %c1_i32_51 : i32
    %c0_52 = arith.constant 0 : index
    %63 = arith.index_cast %62 : i32 to index
    %c0_53 = arith.constant 0 : index
    %c0_54 = arith.constant 0 : index
    %64 = vector.load %arg2[%c0_52, %63, %c0_53, %c0_54] : memref<1x20x8x256xbf16, #tpu.memory_space<vmem>>, vector<1x1x8x128xbf16>
    %65 = vector.shape_cast %64 : vector<1x1x8x128xbf16> to vector<8x128xbf16>
    %c1_i32_55 = arith.constant 1 : i32
    %66 = arith.addi %53, %c1_i32_55 : i32
    %c0_56 = arith.constant 0 : index
    %67 = arith.index_cast %66 : i32 to index
    %c0_57 = arith.constant 0 : index
    %c1_58 = arith.constant 1 : index
    %68 = vector.load %arg2[%c0_56, %67, %c0_57, %c1_58] : memref<1x20x8x256xbf16, #tpu.memory_space<vmem>>, vector<1x1x8x128xbf16>
    %69 = vector.shape_cast %68 : vector<1x1x8x128xbf16> to vector<8x128xbf16>
    %c2_i32_59 = arith.constant 2 : i32
    %70 = arith.addi %53, %c2_i32_59 : i32
    %c0_60 = arith.constant 0 : index
    %71 = arith.index_cast %70 : i32 to index
    %c0_61 = arith.constant 0 : index
    %c0_62 = arith.constant 0 : index
    %72 = vector.load %arg2[%c0_60, %71, %c0_61, %c0_62] : memref<1x20x8x256xbf16, #tpu.memory_space<vmem>>, vector<1x1x8x128xbf16>
    %73 = vector.shape_cast %72 : vector<1x1x8x128xbf16> to vector<8x128xbf16>
    %c2_i32_63 = arith.constant 2 : i32
    %74 = arith.addi %53, %c2_i32_63 : i32
    %c0_64 = arith.constant 0 : index
    %75 = arith.index_cast %74 : i32 to index
    %c0_65 = arith.constant 0 : index
    %c1_66 = arith.constant 1 : index
    %76 = vector.load %arg2[%c0_64, %75, %c0_65, %c1_66] : memref<1x20x8x256xbf16, #tpu.memory_space<vmem>>, vector<1x1x8x128xbf16>
    %77 = vector.shape_cast %76 : vector<1x1x8x128xbf16> to vector<8x128xbf16>
    %c3_i32_67 = arith.constant 3 : i32
    %78 = arith.addi %53, %c3_i32_67 : i32
    %c0_68 = arith.constant 0 : index
    %79 = arith.index_cast %78 : i32 to index
    %c0_69 = arith.constant 0 : index
    %c0_70 = arith.constant 0 : index
    %80 = vector.load %arg2[%c0_68, %79, %c0_69, %c0_70] : memref<1x20x8x256xbf16, #tpu.memory_space<vmem>>, vector<1x1x8x128xbf16>
    %81 = vector.shape_cast %80 : vector<1x1x8x128xbf16> to vector<8x128xbf16>
    %c3_i32_71 = arith.constant 3 : i32
    %82 = arith.addi %53, %c3_i32_71 : i32
    %c0_72 = arith.constant 0 : index
    %83 = arith.index_cast %82 : i32 to index
    %c0_73 = arith.constant 0 : index
    %c1_74 = arith.constant 1 : index
    %84 = vector.load %arg2[%c0_72, %83, %c0_73, %c1_74] : memref<1x20x8x256xbf16, #tpu.memory_space<vmem>>, vector<1x1x8x128xbf16>
    %85 = vector.shape_cast %84 : vector<1x1x8x128xbf16> to vector<8x128xbf16>
    %c4_i32_75 = arith.constant 4 : i32
    %86 = arith.addi %53, %c4_i32_75 : i32
    %c0_76 = arith.constant 0 : index
    %87 = arith.index_cast %86 : i32 to index
    %c0_77 = arith.constant 0 : index
    %c0_78 = arith.constant 0 : index
    %88 = vector.load %arg2[%c0_76, %87, %c0_77, %c0_78] : memref<1x20x8x256xbf16, #tpu.memory_space<vmem>>, vector<1x1x8x128xbf16>
    %89 = vector.shape_cast %88 : vector<1x1x8x128xbf16> to vector<8x128xbf16>
    %c4_i32_79 = arith.constant 4 : i32
    %90 = arith.addi %53, %c4_i32_79 : i32
    %c0_80 = arith.constant 0 : index
    %91 = arith.index_cast %90 : i32 to index
    %c0_81 = arith.constant 0 : index
    %c1_82 = arith.constant 1 : index
    %92 = vector.load %arg2[%c0_80, %91, %c0_81, %c1_82] : memref<1x20x8x256xbf16, #tpu.memory_space<vmem>>, vector<1x1x8x128xbf16>
    %93 = vector.shape_cast %92 : vector<1x1x8x128xbf16> to vector<8x128xbf16>
    %94 = tpu.concatenate %57, %61, %65, %69, %73, %77, %81, %85, %89, %93 in 0 : vector<8x128xbf16>, vector<8x128xbf16>, vector<8x128xbf16>, vector<8x128xbf16>, vector<8x128xbf16>, vector<8x128xbf16>, vector<8x128xbf16>, vector<8x128xbf16>, vector<8x128xbf16>, vector<8x128xbf16> -> vector<80x128xbf16>
    %c0_83 = arith.constant 0 : index
    %c0_84 = arith.constant 0 : index
    %95 = vector.load %arg3[%c0_83, %c0_84] : memref<16x80xbf16, #tpu.memory_space<vmem>>, vector<16x80xbf16>
    %cst_85 = arith.constant dense<0.000000e+00> : vector<16x128xf32>
    %96 = tpu.matmul %95, %94, %cst_85 {dimension_numbers = #tpu.dot_dimension_numbers<[1], [0], [0], [1], [0, 0, 1, 1], [], []>} : vector<16x80xbf16>, vector<80x128xbf16>, vector<16x128xf32> -> vector<16x128xf32>
    %97 = arith.addf %2, %96 : vector<16x128xf32>
    %98 = arith.truncf %97 : vector<16x128xf32> to vector<16x128xbf16>
    %c0_86 = arith.constant 0 : index
    %c1_87 = arith.constant 1 : index
    %c0_88 = arith.constant 0 : index
    %c0_89 = arith.constant 0 : index
    %99 = vector.load %arg5[%c0_86, %c1_87, %c0_88, %c0_89] : memref<1x8x16x128xbf16, #tpu.memory_space<vmem>>, vector<1x1x16x128xbf16>
    %100 = vector.shape_cast %99 : vector<1x1x16x128xbf16> to vector<16x128xbf16>
    %101 = vector.shape_cast %98 : vector<16x128xbf16> to vector<1x1x16x128xbf16>
    tpu.vector_store %arg5[%c0_86, %c1_87, %c0_88, %c0_89], %101 {strides = array<i32>} : memref<1x8x16x128xbf16, #tpu.memory_space<vmem>>, vector<1x1x16x128xbf16>,
    %c4_i32_90 = arith.constant 4 : i32
    %102 = arith.addi %3, %c4_i32_90 : i32
    %c0_i32_91 = arith.constant 0 : i32
    %103 = arith.addi %102, %c0_i32_91 : i32
    %c0_92 = arith.constant 0 : index
    %104 = arith.index_cast %103 : i32 to index
    %c0_93 = arith.constant 0 : index
    %c0_94 = arith.constant 0 : index
    %105 = vector.load %arg2[%c0_92, %104, %c0_93, %c0_94] : memref<1x20x8x256xbf16, #tpu.memory_space<vmem>>, vector<1x1x8x128xbf16>
    %106 = vector.shape_cast %105 : vector<1x1x8x128xbf16> to vector<8x128xbf16>
    %c0_i32_95 = arith.constant 0 : i32
    %107 = arith.addi %102, %c0_i32_95 : i32
    %c0_96 = arith.constant 0 : index
    %108 = arith.index_cast %107 : i32 to index
    %c0_97 = arith.constant 0 : index
    %c1_98 = arith.constant 1 : index
    %109 = vector.load %arg2[%c0_96, %108, %c0_97, %c1_98] : memref<1x20x8x256xbf16, #tpu.memory_space<vmem>>, vector<1x1x8x128xbf16>
    %110 = vector.shape_cast %109 : vector<1x1x8x128xbf16> to vector<8x128xbf16>
    %c1_i32_99 = arith.constant 1 : i32
    %111 = arith.addi %102, %c1_i32_99 : i32
    %c0_100 = arith.constant 0 : index
    %112 = arith.index_cast %111 : i32 to index
    %c0_101 = arith.constant 0 : index
    %c0_102 = arith.constant 0 : index
    %113 = vector.load %arg2[%c0_100, %112, %c0_101, %c0_102] : memref<1x20x8x256xbf16, #tpu.memory_space<vmem>>, vector<1x1x8x128xbf16>
    %114 = vector.shape_cast %113 : vector<1x1x8x128xbf16> to vector<8x128xbf16>
    %c1_i32_103 = arith.constant 1 : i32
    %115 = arith.addi %102, %c1_i32_103 : i32
    %c0_104 = arith.constant 0 : index
    %116 = arith.index_cast %115 : i32 to index
    %c0_105 = arith.constant 0 : index
    %c1_106 = arith.constant 1 : index
    %117 = vector.load %arg2[%c0_104, %116, %c0_105, %c1_106] : memref<1x20x8x256xbf16, #tpu.memory_space<vmem>>, vector<1x1x8x128xbf16>
    %118 = vector.shape_cast %117 : vector<1x1x8x128xbf16> to vector<8x128xbf16>
    %c2_i32_107 = arith.constant 2 : i32
    %119 = arith.addi %102, %c2_i32_107 : i32
    %c0_108 = arith.constant 0 : index
    %120 = arith.index_cast %119 : i32 to index
    %c0_109 = arith.constant 0 : index
    %c0_110 = arith.constant 0 : index
    %121 = vector.load %arg2[%c0_108, %120, %c0_109, %c0_110] : memref<1x20x8x256xbf16, #tpu.memory_space<vmem>>, vector<1x1x8x128xbf16>
    %122 = vector.shape_cast %121 : vector<1x1x8x128xbf16> to vector<8x128xbf16>
    %c2_i32_111 = arith.constant 2 : i32
    %123 = arith.addi %102, %c2_i32_111 : i32
    %c0_112 = arith.constant 0 : index
    %124 = arith.index_cast %123 : i32 to index
    %c0_113 = arith.constant 0 : index
    %c1_114 = arith.constant 1 : index
    %125 = vector.load %arg2[%c0_112, %124, %c0_113, %c1_114] : memref<1x20x8x256xbf16, #tpu.memory_space<vmem>>, vector<1x1x8x128xbf16>
    %126 = vector.shape_cast %125 : vector<1x1x8x128xbf16> to vector<8x128xbf16>
    %c3_i32_115 = arith.constant 3 : i32
    %127 = arith.addi %102, %c3_i32_115 : i32
    %c0_116 = arith.constant 0 : index
    %128 = arith.index_cast %127 : i32 to index
    %c0_117 = arith.constant 0 : index
    %c0_118 = arith.constant 0 : index
    %129 = vector.load %arg2[%c0_116, %128, %c0_117, %c0_118] : memref<1x20x8x256xbf16, #tpu.memory_space<vmem>>, vector<1x1x8x128xbf16>
    %130 = vector.shape_cast %129 : vector<1x1x8x128xbf16> to vector<8x128xbf16>
    %c3_i32_119 = arith.constant 3 : i32
    %131 = arith.addi %102, %c3_i32_119 : i32
    %c0_120 = arith.constant 0 : index
    %132 = arith.index_cast %131 : i32 to index
    %c0_121 = arith.constant 0 : index
    %c1_122 = arith.constant 1 : index
    %133 = vector.load %arg2[%c0_120, %132, %c0_121, %c1_122] : memref<1x20x8x256xbf16, #tpu.memory_space<vmem>>, vector<1x1x8x128xbf16>
    %134 = vector.shape_cast %133 : vector<1x1x8x128xbf16> to vector<8x128xbf16>
    %c4_i32_123 = arith.constant 4 : i32
    %135 = arith.addi %102, %c4_i32_123 : i32
    %c0_124 = arith.constant 0 : index
    %136 = arith.index_cast %135 : i32 to index
    %c0_125 = arith.constant 0 : index
    %c0_126 = arith.constant 0 : index
    %137 = vector.load %arg2[%c0_124, %136, %c0_125, %c0_126] : memref<1x20x8x256xbf16, #tpu.memory_space<vmem>>, vector<1x1x8x128xbf16>
    %138 = vector.shape_cast %137 : vector<1x1x8x128xbf16> to vector<8x128xbf16>
    %c4_i32_127 = arith.constant 4 : i32
    %139 = arith.addi %102, %c4_i32_127 : i32
    %c0_128 = arith.constant 0 : index
    %140 = arith.index_cast %139 : i32 to index
    %c0_129 = arith.constant 0 : index
    %c1_130 = arith.constant 1 : index
    %141 = vector.load %arg2[%c0_128, %140, %c0_129, %c1_130] : memref<1x20x8x256xbf16, #tpu.memory_space<vmem>>, vector<1x1x8x128xbf16>
    %142 = vector.shape_cast %141 : vector<1x1x8x128xbf16> to vector<8x128xbf16>
    %143 = tpu.concatenate %106, %110, %114, %118, %122, %126, %130, %134, %138, %142 in 0 : vector<8x128xbf16>, vector<8x128xbf16>, vector<8x128xbf16>, vector<8x128xbf16>, vector<8x128xbf16>, vector<8x128xbf16>, vector<8x128xbf16>, vector<8x128xbf16>, vector<8x128xbf16>, vector<8x128xbf16> -> vector<80x128xbf16>
    %c0_131 = arith.constant 0 : index
    %c0_132 = arith.constant 0 : index
    %144 = vector.load %arg3[%c0_131, %c0_132] : memref<16x80xbf16, #tpu.memory_space<vmem>>, vector<16x80xbf16>
    %cst_133 = arith.constant dense<0.000000e+00> : vector<16x128xf32>
    %145 = tpu.matmul %144, %143, %cst_133 {dimension_numbers = #tpu.dot_dimension_numbers<[1], [0], [0], [1], [0, 0, 1, 1], [], []>} : vector<16x80xbf16>, vector<80x128xbf16>, vector<16x128xf32> -> vector<16x128xf32>
    %146 = arith.addf %2, %145 : vector<16x128xf32>
    %147 = arith.truncf %146 : vector<16x128xf32> to vector<16x128xbf16>
    %c0_134 = arith.constant 0 : index
    %c2 = arith.constant 2 : index
    %c0_135 = arith.constant 0 : index
    %c0_136 = arith.constant 0 : index
    %148 = vector.load %arg5[%c0_134, %c2, %c0_135, %c0_136] : memref<1x8x16x128xbf16, #tpu.memory_space<vmem>>, vector<1x1x16x128xbf16>
    %149 = vector.shape_cast %148 : vector<1x1x16x128xbf16> to vector<16x128xbf16>
    %150 = vector.shape_cast %147 : vector<16x128xbf16> to vector<1x1x16x128xbf16>
    tpu.vector_store %arg5[%c0_134, %c2, %c0_135, %c0_136], %150 {strides = array<i32>} : memref<1x8x16x128xbf16, #tpu.memory_space<vmem>>, vector<1x1x16x128xbf16>,
    %c6_i32 = arith.constant 6 : i32
    %151 = arith.addi %3, %c6_i32 : i32
    %c0_i32_137 = arith.constant 0 : i32
    %152 = arith.addi %151, %c0_i32_137 : i32
    %c0_138 = arith.constant 0 : index
    %153 = arith.index_cast %152 : i32 to index
    %c0_139 = arith.constant 0 : index
    %c0_140 = arith.constant 0 : index
    %154 = vector.load %arg2[%c0_138, %153, %c0_139, %c0_140] : memref<1x20x8x256xbf16, #tpu.memory_space<vmem>>, vector<1x1x8x128xbf16>
    %155 = vector.shape_cast %154 : vector<1x1x8x128xbf16> to vector<8x128xbf16>
    %c0_i32_141 = arith.constant 0 : i32
    %156 = arith.addi %151, %c0_i32_141 : i32
    %c0_142 = arith.constant 0 : index
    %157 = arith.index_cast %156 : i32 to index
    %c0_143 = arith.constant 0 : index
    %c1_144 = arith.constant 1 : index
    %158 = vector.load %arg2[%c0_142, %157, %c0_143, %c1_144] : memref<1x20x8x256xbf16, #tpu.memory_space<vmem>>, vector<1x1x8x128xbf16>
    %159 = vector.shape_cast %158 : vector<1x1x8x128xbf16> to vector<8x128xbf16>
    %c1_i32_145 = arith.constant 1 : i32
    %160 = arith.addi %151, %c1_i32_145 : i32
    %c0_146 = arith.constant 0 : index
    %161 = arith.index_cast %160 : i32 to index
    %c0_147 = arith.constant 0 : index
    %c0_148 = arith.constant 0 : index
    %162 = vector.load %arg2[%c0_146, %161, %c0_147, %c0_148] : memref<1x20x8x256xbf16, #tpu.memory_space<vmem>>, vector<1x1x8x128xbf16>
    %163 = vector.shape_cast %162 : vector<1x1x8x128xbf16> to vector<8x128xbf16>
    %c1_i32_149 = arith.constant 1 : i32
    %164 = arith.addi %151, %c1_i32_149 : i32
    %c0_150 = arith.constant 0 : index
    %165 = arith.index_cast %164 : i32 to index
    %c0_151 = arith.constant 0 : index
    %c1_152 = arith.constant 1 : index
    %166 = vector.load %arg2[%c0_150, %165, %c0_151, %c1_152] : memref<1x20x8x256xbf16, #tpu.memory_space<vmem>>, vector<1x1x8x128xbf16>
    %167 = vector.shape_cast %166 : vector<1x1x8x128xbf16> to vector<8x128xbf16>
    %c2_i32_153 = arith.constant 2 : i32
    %168 = arith.addi %151, %c2_i32_153 : i32
    %c0_154 = arith.constant 0 : index
    %169 = arith.index_cast %168 : i32 to index
    %c0_155 = arith.constant 0 : index
    %c0_156 = arith.constant 0 : index
    %170 = vector.load %arg2[%c0_154, %169, %c0_155, %c0_156] : memref<1x20x8x256xbf16, #tpu.memory_space<vmem>>, vector<1x1x8x128xbf16>
    %171 = vector.shape_cast %170 : vector<1x1x8x128xbf16> to vector<8x128xbf16>
    %c2_i32_157 = arith.constant 2 : i32
    %172 = arith.addi %151, %c2_i32_157 : i32
    %c0_158 = arith.constant 0 : index
    %173 = arith.index_cast %172 : i32 to index
    %c0_159 = arith.constant 0 : index
    %c1_160 = arith.constant 1 : index
    %174 = vector.load %arg2[%c0_158, %173, %c0_159, %c1_160] : memref<1x20x8x256xbf16, #tpu.memory_space<vmem>>, vector<1x1x8x128xbf16>
    %175 = vector.shape_cast %174 : vector<1x1x8x128xbf16> to vector<8x128xbf16>
    %c3_i32_161 = arith.constant 3 : i32
    %176 = arith.addi %151, %c3_i32_161 : i32
    %c0_162 = arith.constant 0 : index
    %177 = arith.index_cast %176 : i32 to index
    %c0_163 = arith.constant 0 : index
    %c0_164 = arith.constant 0 : index
    %178 = vector.load %arg2[%c0_162, %177, %c0_163, %c0_164] : memref<1x20x8x256xbf16, #tpu.memory_space<vmem>>, vector<1x1x8x128xbf16>
    %179 = vector.shape_cast %178 : vector<1x1x8x128xbf16> to vector<8x128xbf16>
    %c3_i32_165 = arith.constant 3 : i32
    %180 = arith.addi %151, %c3_i32_165 : i32
    %c0_166 = arith.constant 0 : index
    %181 = arith.index_cast %180 : i32 to index
    %c0_167 = arith.constant 0 : index
    %c1_168 = arith.constant 1 : index
    %182 = vector.load %arg2[%c0_166, %181, %c0_167, %c1_168] : memref<1x20x8x256xbf16, #tpu.memory_space<vmem>>, vector<1x1x8x128xbf16>
    %183 = vector.shape_cast %182 : vector<1x1x8x128xbf16> to vector<8x128xbf16>
    %c4_i32_169 = arith.constant 4 : i32
    %184 = arith.addi %151, %c4_i32_169 : i32
    %c0_170 = arith.constant 0 : index
    %185 = arith.index_cast %184 : i32 to index
    %c0_171 = arith.constant 0 : index
    %c0_172 = arith.constant 0 : index
    %186 = vector.load %arg2[%c0_170, %185, %c0_171, %c0_172] : memref<1x20x8x256xbf16, #tpu.memory_space<vmem>>, vector<1x1x8x128xbf16>
    %187 = vector.shape_cast %186 : vector<1x1x8x128xbf16> to vector<8x128xbf16>
    %c4_i32_173 = arith.constant 4 : i32
    %188 = arith.addi %151, %c4_i32_173 : i32
    %c0_174 = arith.constant 0 : index
    %189 = arith.index_cast %188 : i32 to index
    %c0_175 = arith.constant 0 : index
    %c1_176 = arith.constant 1 : index
    %190 = vector.load %arg2[%c0_174, %189, %c0_175, %c1_176] : memref<1x20x8x256xbf16, #tpu.memory_space<vmem>>, vector<1x1x8x128xbf16>
    %191 = vector.shape_cast %190 : vector<1x1x8x128xbf16> to vector<8x128xbf16>
    %192 = tpu.concatenate %155, %159, %163, %167, %171, %175, %179, %183, %187, %191 in 0 : vector<8x128xbf16>, vector<8x128xbf16>, vector<8x128xbf16>, vector<8x128xbf16>, vector<8x128xbf16>, vector<8x128xbf16>, vector<8x128xbf16>, vector<8x128xbf16>, vector<8x128xbf16>, vector<8x128xbf16> -> vector<80x128xbf16>
    %c0_177 = arith.constant 0 : index
    %c0_178 = arith.constant 0 : index
    %193 = vector.load %arg3[%c0_177, %c0_178] : memref<16x80xbf16, #tpu.memory_space<vmem>>, vector<16x80xbf16>
    %cst_179 = arith.constant dense<0.000000e+00> : vector<16x128xf32>
    %194 = tpu.matmul %193, %192, %cst_179 {dimension_numbers = #tpu.dot_dimension_numbers<[1], [0], [0], [1], [0, 0, 1, 1], [], []>} : vector<16x80xbf16>, vector<80x128xbf16>, vector<16x128xf32> -> vector<16x128xf32>
    %195 = arith.addf %2, %194 : vector<16x128xf32>
    %196 = arith.truncf %195 : vector<16x128xf32> to vector<16x128xbf16>
    %c0_180 = arith.constant 0 : index
    %c3 = arith.constant 3 : index
    %c0_181 = arith.constant 0 : index
    %c0_182 = arith.constant 0 : index
    %197 = vector.load %arg5[%c0_180, %c3, %c0_181, %c0_182] : memref<1x8x16x128xbf16, #tpu.memory_space<vmem>>, vector<1x1x16x128xbf16>
    %198 = vector.shape_cast %197 : vector<1x1x16x128xbf16> to vector<16x128xbf16>
    %199 = vector.shape_cast %196 : vector<16x128xbf16> to vector<1x1x16x128xbf16>
    tpu.vector_store %arg5[%c0_180, %c3, %c0_181, %c0_182], %199 {strides = array<i32>} : memref<1x8x16x128xbf16, #tpu.memory_space<vmem>>, vector<1x1x16x128xbf16>,
    %c8_i32 = arith.constant 8 : i32
    %200 = arith.addi %3, %c8_i32 : i32
    %c0_i32_183 = arith.constant 0 : i32
    %201 = arith.addi %200, %c0_i32_183 : i32
    %c0_184 = arith.constant 0 : index
    %202 = arith.index_cast %201 : i32 to index
    %c0_185 = arith.constant 0 : index
    %c0_186 = arith.constant 0 : index
    %203 = vector.load %arg2[%c0_184, %202, %c0_185, %c0_186] : memref<1x20x8x256xbf16, #tpu.memory_space<vmem>>, vector<1x1x8x128xbf16>
    %204 = vector.shape_cast %203 : vector<1x1x8x128xbf16> to vector<8x128xbf16>
    %c0_i32_187 = arith.constant 0 : i32
    %205 = arith.addi %200, %c0_i32_187 : i32
    %c0_188 = arith.constant 0 : index
    %206 = arith.index_cast %205 : i32 to index
    %c0_189 = arith.constant 0 : index
    %c1_190 = arith.constant 1 : index
    %207 = vector.load %arg2[%c0_188, %206, %c0_189, %c1_190] : memref<1x20x8x256xbf16, #tpu.memory_space<vmem>>, vector<1x1x8x128xbf16>
    %208 = vector.shape_cast %207 : vector<1x1x8x128xbf16> to vector<8x128xbf16>
    %c1_i32_191 = arith.constant 1 : i32
    %209 = arith.addi %200, %c1_i32_191 : i32
    %c0_192 = arith.constant 0 : index
    %210 = arith.index_cast %209 : i32 to index
    %c0_193 = arith.constant 0 : index
    %c0_194 = arith.constant 0 : index
    %211 = vector.load %arg2[%c0_192, %210, %c0_193, %c0_194] : memref<1x20x8x256xbf16, #tpu.memory_space<vmem>>, vector<1x1x8x128xbf16>
    %212 = vector.shape_cast %211 : vector<1x1x8x128xbf16> to vector<8x128xbf16>
    %c1_i32_195 = arith.constant 1 : i32
    %213 = arith.addi %200, %c1_i32_195 : i32
    %c0_196 = arith.constant 0 : index
    %214 = arith.index_cast %213 : i32 to index
    %c0_197 = arith.constant 0 : index
    %c1_198 = arith.constant 1 : index
    %215 = vector.load %arg2[%c0_196, %214, %c0_197, %c1_198] : memref<1x20x8x256xbf16, #tpu.memory_space<vmem>>, vector<1x1x8x128xbf16>
    %216 = vector.shape_cast %215 : vector<1x1x8x128xbf16> to vector<8x128xbf16>
    %c2_i32_199 = arith.constant 2 : i32
    %217 = arith.addi %200, %c2_i32_199 : i32
    %c0_200 = arith.constant 0 : index
    %218 = arith.index_cast %217 : i32 to index
    %c0_201 = arith.constant 0 : index
    %c0_202 = arith.constant 0 : index
    %219 = vector.load %arg2[%c0_200, %218, %c0_201, %c0_202] : memref<1x20x8x256xbf16, #tpu.memory_space<vmem>>, vector<1x1x8x128xbf16>
    %220 = vector.shape_cast %219 : vector<1x1x8x128xbf16> to vector<8x128xbf16>
    %c2_i32_203 = arith.constant 2 : i32
    %221 = arith.addi %200, %c2_i32_203 : i32
    %c0_204 = arith.constant 0 : index
    %222 = arith.index_cast %221 : i32 to index
    %c0_205 = arith.constant 0 : index
    %c1_206 = arith.constant 1 : index
    %223 = vector.load %arg2[%c0_204, %222, %c0_205, %c1_206] : memref<1x20x8x256xbf16, #tpu.memory_space<vmem>>, vector<1x1x8x128xbf16>
    %224 = vector.shape_cast %223 : vector<1x1x8x128xbf16> to vector<8x128xbf16>
    %c3_i32_207 = arith.constant 3 : i32
    %225 = arith.addi %200, %c3_i32_207 : i32
    %c0_208 = arith.constant 0 : index
    %226 = arith.index_cast %225 : i32 to index
    %c0_209 = arith.constant 0 : index
    %c0_210 = arith.constant 0 : index
    %227 = vector.load %arg2[%c0_208, %226, %c0_209, %c0_210] : memref<1x20x8x256xbf16, #tpu.memory_space<vmem>>, vector<1x1x8x128xbf16>
    %228 = vector.shape_cast %227 : vector<1x1x8x128xbf16> to vector<8x128xbf16>
    %c3_i32_211 = arith.constant 3 : i32
    %229 = arith.addi %200, %c3_i32_211 : i32
    %c0_212 = arith.constant 0 : index
    %230 = arith.index_cast %229 : i32 to index
    %c0_213 = arith.constant 0 : index
    %c1_214 = arith.constant 1 : index
    %231 = vector.load %arg2[%c0_212, %230, %c0_213, %c1_214] : memref<1x20x8x256xbf16, #tpu.memory_space<vmem>>, vector<1x1x8x128xbf16>
    %232 = vector.shape_cast %231 : vector<1x1x8x128xbf16> to vector<8x128xbf16>
    %c4_i32_215 = arith.constant 4 : i32
    %233 = arith.addi %200, %c4_i32_215 : i32
    %c0_216 = arith.constant 0 : index
    %234 = arith.index_cast %233 : i32 to index
    %c0_217 = arith.constant 0 : index
    %c0_218 = arith.constant 0 : index
    %235 = vector.load %arg2[%c0_216, %234, %c0_217, %c0_218] : memref<1x20x8x256xbf16, #tpu.memory_space<vmem>>, vector<1x1x8x128xbf16>
    %236 = vector.shape_cast %235 : vector<1x1x8x128xbf16> to vector<8x128xbf16>
    %c4_i32_219 = arith.constant 4 : i32
    %237 = arith.addi %200, %c4_i32_219 : i32
    %c0_220 = arith.constant 0 : index
    %238 = arith.index_cast %237 : i32 to index
    %c0_221 = arith.constant 0 : index
    %c1_222 = arith.constant 1 : index
    %239 = vector.load %arg2[%c0_220, %238, %c0_221, %c1_222] : memref<1x20x8x256xbf16, #tpu.memory_space<vmem>>, vector<1x1x8x128xbf16>
    %240 = vector.shape_cast %239 : vector<1x1x8x128xbf16> to vector<8x128xbf16>
    %241 = tpu.concatenate %204, %208, %212, %216, %220, %224, %228, %232, %236, %240 in 0 : vector<8x128xbf16>, vector<8x128xbf16>, vector<8x128xbf16>, vector<8x128xbf16>, vector<8x128xbf16>, vector<8x128xbf16>, vector<8x128xbf16>, vector<8x128xbf16>, vector<8x128xbf16>, vector<8x128xbf16> -> vector<80x128xbf16>
    %c0_223 = arith.constant 0 : index
    %c0_224 = arith.constant 0 : index
    %242 = vector.load %arg3[%c0_223, %c0_224] : memref<16x80xbf16, #tpu.memory_space<vmem>>, vector<16x80xbf16>
    %cst_225 = arith.constant dense<0.000000e+00> : vector<16x128xf32>
    %243 = tpu.matmul %242, %241, %cst_225 {dimension_numbers = #tpu.dot_dimension_numbers<[1], [0], [0], [1], [0, 0, 1, 1], [], []>} : vector<16x80xbf16>, vector<80x128xbf16>, vector<16x128xf32> -> vector<16x128xf32>
    %244 = arith.addf %2, %243 : vector<16x128xf32>
    %245 = arith.truncf %244 : vector<16x128xf32> to vector<16x128xbf16>
    %c0_226 = arith.constant 0 : index
    %c4 = arith.constant 4 : index
    %c0_227 = arith.constant 0 : index
    %c0_228 = arith.constant 0 : index
    %246 = vector.load %arg5[%c0_226, %c4, %c0_227, %c0_228] : memref<1x8x16x128xbf16, #tpu.memory_space<vmem>>, vector<1x1x16x128xbf16>
    %247 = vector.shape_cast %246 : vector<1x1x16x128xbf16> to vector<16x128xbf16>
    %248 = vector.shape_cast %245 : vector<16x128xbf16> to vector<1x1x16x128xbf16>
    tpu.vector_store %arg5[%c0_226, %c4, %c0_227, %c0_228], %248 {strides = array<i32>} : memref<1x8x16x128xbf16, #tpu.memory_space<vmem>>, vector<1x1x16x128xbf16>,
    %c10_i32 = arith.constant 10 : i32
    %249 = arith.addi %3, %c10_i32 : i32
    %c0_i32_229 = arith.constant 0 : i32
    %250 = arith.addi %249, %c0_i32_229 : i32
    %c0_230 = arith.constant 0 : index
    %251 = arith.index_cast %250 : i32 to index
    %c0_231 = arith.constant 0 : index
    %c0_232 = arith.constant 0 : index
    %252 = vector.load %arg2[%c0_230, %251, %c0_231, %c0_232] : memref<1x20x8x256xbf16, #tpu.memory_space<vmem>>, vector<1x1x8x128xbf16>
    %253 = vector.shape_cast %252 : vector<1x1x8x128xbf16> to vector<8x128xbf16>
    %c0_i32_233 = arith.constant 0 : i32
    %254 = arith.addi %249, %c0_i32_233 : i32
    %c0_234 = arith.constant 0 : index
    %255 = arith.index_cast %254 : i32 to index
    %c0_235 = arith.constant 0 : index
    %c1_236 = arith.constant 1 : index
    %256 = vector.load %arg2[%c0_234, %255, %c0_235, %c1_236] : memref<1x20x8x256xbf16, #tpu.memory_space<vmem>>, vector<1x1x8x128xbf16>
    %257 = vector.shape_cast %256 : vector<1x1x8x128xbf16> to vector<8x128xbf16>
    %c1_i32_237 = arith.constant 1 : i32
    %258 = arith.addi %249, %c1_i32_237 : i32
    %c0_238 = arith.constant 0 : index
    %259 = arith.index_cast %258 : i32 to index
    %c0_239 = arith.constant 0 : index
    %c0_240 = arith.constant 0 : index
    %260 = vector.load %arg2[%c0_238, %259, %c0_239, %c0_240] : memref<1x20x8x256xbf16, #tpu.memory_space<vmem>>, vector<1x1x8x128xbf16>
    %261 = vector.shape_cast %260 : vector<1x1x8x128xbf16> to vector<8x128xbf16>
    %c1_i32_241 = arith.constant 1 : i32
    %262 = arith.addi %249, %c1_i32_241 : i32
    %c0_242 = arith.constant 0 : index
    %263 = arith.index_cast %262 : i32 to index
    %c0_243 = arith.constant 0 : index
    %c1_244 = arith.constant 1 : index
    %264 = vector.load %arg2[%c0_242, %263, %c0_243, %c1_244] : memref<1x20x8x256xbf16, #tpu.memory_space<vmem>>, vector<1x1x8x128xbf16>
    %265 = vector.shape_cast %264 : vector<1x1x8x128xbf16> to vector<8x128xbf16>
    %c2_i32_245 = arith.constant 2 : i32
    %266 = arith.addi %249, %c2_i32_245 : i32
    %c0_246 = arith.constant 0 : index
    %267 = arith.index_cast %266 : i32 to index
    %c0_247 = arith.constant 0 : index
    %c0_248 = arith.constant 0 : index
    %268 = vector.load %arg2[%c0_246, %267, %c0_247, %c0_248] : memref<1x20x8x256xbf16, #tpu.memory_space<vmem>>, vector<1x1x8x128xbf16>
    %269 = vector.shape_cast %268 : vector<1x1x8x128xbf16> to vector<8x128xbf16>
    %c2_i32_249 = arith.constant 2 : i32
    %270 = arith.addi %249, %c2_i32_249 : i32
    %c0_250 = arith.constant 0 : index
    %271 = arith.index_cast %270 : i32 to index
    %c0_251 = arith.constant 0 : index
    %c1_252 = arith.constant 1 : index
    %272 = vector.load %arg2[%c0_250, %271, %c0_251, %c1_252] : memref<1x20x8x256xbf16, #tpu.memory_space<vmem>>, vector<1x1x8x128xbf16>
    %273 = vector.shape_cast %272 : vector<1x1x8x128xbf16> to vector<8x128xbf16>
    %c3_i32_253 = arith.constant 3 : i32
    %274 = arith.addi %249, %c3_i32_253 : i32
    %c0_254 = arith.constant 0 : index
    %275 = arith.index_cast %274 : i32 to index
    %c0_255 = arith.constant 0 : index
    %c0_256 = arith.constant 0 : index
    %276 = vector.load %arg2[%c0_254, %275, %c0_255, %c0_256] : memref<1x20x8x256xbf16, #tpu.memory_space<vmem>>, vector<1x1x8x128xbf16>
    %277 = vector.shape_cast %276 : vector<1x1x8x128xbf16> to vector<8x128xbf16>
    %c3_i32_257 = arith.constant 3 : i32
    %278 = arith.addi %249, %c3_i32_257 : i32
    %c0_258 = arith.constant 0 : index
    %279 = arith.index_cast %278 : i32 to index
    %c0_259 = arith.constant 0 : index
    %c1_260 = arith.constant 1 : index
    %280 = vector.load %arg2[%c0_258, %279, %c0_259, %c1_260] : memref<1x20x8x256xbf16, #tpu.memory_space<vmem>>, vector<1x1x8x128xbf16>
    %281 = vector.shape_cast %280 : vector<1x1x8x128xbf16> to vector<8x128xbf16>
    %c4_i32_261 = arith.constant 4 : i32
    %282 = arith.addi %249, %c4_i32_261 : i32
    %c0_262 = arith.constant 0 : index
    %283 = arith.index_cast %282 : i32 to index
    %c0_263 = arith.constant 0 : index
    %c0_264 = arith.constant 0 : index
    %284 = vector.load %arg2[%c0_262, %283, %c0_263, %c0_264] : memref<1x20x8x256xbf16, #tpu.memory_space<vmem>>, vector<1x1x8x128xbf16>
    %285 = vector.shape_cast %284 : vector<1x1x8x128xbf16> to vector<8x128xbf16>
    %c4_i32_265 = arith.constant 4 : i32
    %286 = arith.addi %249, %c4_i32_265 : i32
    %c0_266 = arith.constant 0 : index
    %287 = arith.index_cast %286 : i32 to index
    %c0_267 = arith.constant 0 : index
    %c1_268 = arith.constant 1 : index
    %288 = vector.load %arg2[%c0_266, %287, %c0_267, %c1_268] : memref<1x20x8x256xbf16, #tpu.memory_space<vmem>>, vector<1x1x8x128xbf16>
    %289 = vector.shape_cast %288 : vector<1x1x8x128xbf16> to vector<8x128xbf16>
    %290 = tpu.concatenate %253, %257, %261, %265, %269, %273, %277, %281, %285, %289 in 0 : vector<8x128xbf16>, vector<8x128xbf16>, vector<8x128xbf16>, vector<8x128xbf16>, vector<8x128xbf16>, vector<8x128xbf16>, vector<8x128xbf16>, vector<8x128xbf16>, vector<8x128xbf16>, vector<8x128xbf16> -> vector<80x128xbf16>
    %c0_269 = arith.constant 0 : index
    %c0_270 = arith.constant 0 : index
    %291 = vector.load %arg3[%c0_269, %c0_270] : memref<16x80xbf16, #tpu.memory_space<vmem>>, vector<16x80xbf16>
    %cst_271 = arith.constant dense<0.000000e+00> : vector<16x128xf32>
    %292 = tpu.matmul %291, %290, %cst_271 {dimension_numbers = #tpu.dot_dimension_numbers<[1], [0], [0], [1], [0, 0, 1, 1], [], []>} : vector<16x80xbf16>, vector<80x128xbf16>, vector<16x128xf32> -> vector<16x128xf32>
    %293 = arith.addf %2, %292 : vector<16x128xf32>
    %294 = arith.truncf %293 : vector<16x128xf32> to vector<16x128xbf16>
    %c0_272 = arith.constant 0 : index
    %c5 = arith.constant 5 : index
    %c0_273 = arith.constant 0 : index
    %c0_274 = arith.constant 0 : index
    %295 = vector.load %arg5[%c0_272, %c5, %c0_273, %c0_274] : memref<1x8x16x128xbf16, #tpu.memory_space<vmem>>, vector<1x1x16x128xbf16>
    %296 = vector.shape_cast %295 : vector<1x1x16x128xbf16> to vector<16x128xbf16>
    %297 = vector.shape_cast %294 : vector<16x128xbf16> to vector<1x1x16x128xbf16>
    tpu.vector_store %arg5[%c0_272, %c5, %c0_273, %c0_274], %297 {strides = array<i32>} : memref<1x8x16x128xbf16, #tpu.memory_space<vmem>>, vector<1x1x16x128xbf16>,
    %c12_i32 = arith.constant 12 : i32
    %298 = arith.addi %3, %c12_i32 : i32
    %c0_i32_275 = arith.constant 0 : i32
    %299 = arith.addi %298, %c0_i32_275 : i32
    %c0_276 = arith.constant 0 : index
    %300 = arith.index_cast %299 : i32 to index
    %c0_277 = arith.constant 0 : index
    %c0_278 = arith.constant 0 : index
    %301 = vector.load %arg2[%c0_276, %300, %c0_277, %c0_278] : memref<1x20x8x256xbf16, #tpu.memory_space<vmem>>, vector<1x1x8x128xbf16>
    %302 = vector.shape_cast %301 : vector<1x1x8x128xbf16> to vector<8x128xbf16>
    %c0_i32_279 = arith.constant 0 : i32
    %303 = arith.addi %298, %c0_i32_279 : i32
    %c0_280 = arith.constant 0 : index
    %304 = arith.index_cast %303 : i32 to index
    %c0_281 = arith.constant 0 : index
    %c1_282 = arith.constant 1 : index
    %305 = vector.load %arg2[%c0_280, %304, %c0_281, %c1_282] : memref<1x20x8x256xbf16, #tpu.memory_space<vmem>>, vector<1x1x8x128xbf16>
    %306 = vector.shape_cast %305 : vector<1x1x8x128xbf16> to vector<8x128xbf16>
    %c1_i32_283 = arith.constant 1 : i32
    %307 = arith.addi %298, %c1_i32_283 : i32
    %c0_284 = arith.constant 0 : index
    %308 = arith.index_cast %307 : i32 to index
    %c0_285 = arith.constant 0 : index
    %c0_286 = arith.constant 0 : index
    %309 = vector.load %arg2[%c0_284, %308, %c0_285, %c0_286] : memref<1x20x8x256xbf16, #tpu.memory_space<vmem>>, vector<1x1x8x128xbf16>
    %310 = vector.shape_cast %309 : vector<1x1x8x128xbf16> to vector<8x128xbf16>
    %c1_i32_287 = arith.constant 1 : i32
    %311 = arith.addi %298, %c1_i32_287 : i32
    %c0_288 = arith.constant 0 : index
    %312 = arith.index_cast %311 : i32 to index
    %c0_289 = arith.constant 0 : index
    %c1_290 = arith.constant 1 : index
    %313 = vector.load %arg2[%c0_288, %312, %c0_289, %c1_290] : memref<1x20x8x256xbf16, #tpu.memory_space<vmem>>, vector<1x1x8x128xbf16>
    %314 = vector.shape_cast %313 : vector<1x1x8x128xbf16> to vector<8x128xbf16>
    %c2_i32_291 = arith.constant 2 : i32
    %315 = arith.addi %298, %c2_i32_291 : i32
    %c0_292 = arith.constant 0 : index
    %316 = arith.index_cast %315 : i32 to index
    %c0_293 = arith.constant 0 : index
    %c0_294 = arith.constant 0 : index
    %317 = vector.load %arg2[%c0_292, %316, %c0_293, %c0_294] : memref<1x20x8x256xbf16, #tpu.memory_space<vmem>>, vector<1x1x8x128xbf16>
    %318 = vector.shape_cast %317 : vector<1x1x8x128xbf16> to vector<8x128xbf16>
    %c2_i32_295 = arith.constant 2 : i32
    %319 = arith.addi %298, %c2_i32_295 : i32
    %c0_296 = arith.constant 0 : index
    %320 = arith.index_cast %319 : i32 to index
    %c0_297 = arith.constant 0 : index
    %c1_298 = arith.constant 1 : index
    %321 = vector.load %arg2[%c0_296, %320, %c0_297, %c1_298] : memref<1x20x8x256xbf16, #tpu.memory_space<vmem>>, vector<1x1x8x128xbf16>
    %322 = vector.shape_cast %321 : vector<1x1x8x128xbf16> to vector<8x128xbf16>
    %c3_i32_299 = arith.constant 3 : i32
    %323 = arith.addi %298, %c3_i32_299 : i32
    %c0_300 = arith.constant 0 : index
    %324 = arith.index_cast %323 : i32 to index
    %c0_301 = arith.constant 0 : index
    %c0_302 = arith.constant 0 : index
    %325 = vector.load %arg2[%c0_300, %324, %c0_301, %c0_302] : memref<1x20x8x256xbf16, #tpu.memory_space<vmem>>, vector<1x1x8x128xbf16>
    %326 = vector.shape_cast %325 : vector<1x1x8x128xbf16> to vector<8x128xbf16>
    %c3_i32_303 = arith.constant 3 : i32
    %327 = arith.addi %298, %c3_i32_303 : i32
    %c0_304 = arith.constant 0 : index
    %328 = arith.index_cast %327 : i32 to index
    %c0_305 = arith.constant 0 : index
    %c1_306 = arith.constant 1 : index
    %329 = vector.load %arg2[%c0_304, %328, %c0_305, %c1_306] : memref<1x20x8x256xbf16, #tpu.memory_space<vmem>>, vector<1x1x8x128xbf16>
    %330 = vector.shape_cast %329 : vector<1x1x8x128xbf16> to vector<8x128xbf16>
    %c4_i32_307 = arith.constant 4 : i32
    %331 = arith.addi %298, %c4_i32_307 : i32
    %c0_308 = arith.constant 0 : index
    %332 = arith.index_cast %331 : i32 to index
    %c0_309 = arith.constant 0 : index
    %c0_310 = arith.constant 0 : index
    %333 = vector.load %arg2[%c0_308, %332, %c0_309, %c0_310] : memref<1x20x8x256xbf16, #tpu.memory_space<vmem>>, vector<1x1x8x128xbf16>
    %334 = vector.shape_cast %333 : vector<1x1x8x128xbf16> to vector<8x128xbf16>
    %c4_i32_311 = arith.constant 4 : i32
    %335 = arith.addi %298, %c4_i32_311 : i32
    %c0_312 = arith.constant 0 : index
    %336 = arith.index_cast %335 : i32 to index
    %c0_313 = arith.constant 0 : index
    %c1_314 = arith.constant 1 : index
    %337 = vector.load %arg2[%c0_312, %336, %c0_313, %c1_314] : memref<1x20x8x256xbf16, #tpu.memory_space<vmem>>, vector<1x1x8x128xbf16>
    %338 = vector.shape_cast %337 : vector<1x1x8x128xbf16> to vector<8x128xbf16>
    %339 = tpu.concatenate %302, %306, %310, %314, %318, %322, %326, %330, %334, %338 in 0 : vector<8x128xbf16>, vector<8x128xbf16>, vector<8x128xbf16>, vector<8x128xbf16>, vector<8x128xbf16>, vector<8x128xbf16>, vector<8x128xbf16>, vector<8x128xbf16>, vector<8x128xbf16>, vector<8x128xbf16> -> vector<80x128xbf16>
    %c0_315 = arith.constant 0 : index
    %c0_316 = arith.constant 0 : index
    %340 = vector.load %arg3[%c0_315, %c0_316] : memref<16x80xbf16, #tpu.memory_space<vmem>>, vector<16x80xbf16>
    %cst_317 = arith.constant dense<0.000000e+00> : vector<16x128xf32>
    %341 = tpu.matmul %340, %339, %cst_317 {dimension_numbers = #tpu.dot_dimension_numbers<[1], [0], [0], [1], [0, 0, 1, 1], [], []>} : vector<16x80xbf16>, vector<80x128xbf16>, vector<16x128xf32> -> vector<16x128xf32>
    %342 = arith.addf %2, %341 : vector<16x128xf32>
    %343 = arith.truncf %342 : vector<16x128xf32> to vector<16x128xbf16>
    %c0_318 = arith.constant 0 : index
    %c6 = arith.constant 6 : index
    %c0_319 = arith.constant 0 : index
    %c0_320 = arith.constant 0 : index
    %344 = vector.load %arg5[%c0_318, %c6, %c0_319, %c0_320] : memref<1x8x16x128xbf16, #tpu.memory_space<vmem>>, vector<1x1x16x128xbf16>
    %345 = vector.shape_cast %344 : vector<1x1x16x128xbf16> to vector<16x128xbf16>
    %346 = vector.shape_cast %343 : vector<16x128xbf16> to vector<1x1x16x128xbf16>
    tpu.vector_store %arg5[%c0_318, %c6, %c0_319, %c0_320], %346 {strides = array<i32>} : memref<1x8x16x128xbf16, #tpu.memory_space<vmem>>, vector<1x1x16x128xbf16>,
    %c14_i32 = arith.constant 14 : i32
    %347 = arith.addi %3, %c14_i32 : i32
    %c0_i32_321 = arith.constant 0 : i32
    %348 = arith.addi %347, %c0_i32_321 : i32
    %c0_322 = arith.constant 0 : index
    %349 = arith.index_cast %348 : i32 to index
    %c0_323 = arith.constant 0 : index
    %c0_324 = arith.constant 0 : index
    %350 = vector.load %arg2[%c0_322, %349, %c0_323, %c0_324] : memref<1x20x8x256xbf16, #tpu.memory_space<vmem>>, vector<1x1x8x128xbf16>
    %351 = vector.shape_cast %350 : vector<1x1x8x128xbf16> to vector<8x128xbf16>
    %c0_i32_325 = arith.constant 0 : i32
    %352 = arith.addi %347, %c0_i32_325 : i32
    %c0_326 = arith.constant 0 : index
    %353 = arith.index_cast %352 : i32 to index
    %c0_327 = arith.constant 0 : index
    %c1_328 = arith.constant 1 : index
    %354 = vector.load %arg2[%c0_326, %353, %c0_327, %c1_328] : memref<1x20x8x256xbf16, #tpu.memory_space<vmem>>, vector<1x1x8x128xbf16>
    %355 = vector.shape_cast %354 : vector<1x1x8x128xbf16> to vector<8x128xbf16>
    %c1_i32_329 = arith.constant 1 : i32
    %356 = arith.addi %347, %c1_i32_329 : i32
    %c0_330 = arith.constant 0 : index
    %357 = arith.index_cast %356 : i32 to index
    %c0_331 = arith.constant 0 : index
    %c0_332 = arith.constant 0 : index
    %358 = vector.load %arg2[%c0_330, %357, %c0_331, %c0_332] : memref<1x20x8x256xbf16, #tpu.memory_space<vmem>>, vector<1x1x8x128xbf16>
    %359 = vector.shape_cast %358 : vector<1x1x8x128xbf16> to vector<8x128xbf16>
    %c1_i32_333 = arith.constant 1 : i32
    %360 = arith.addi %347, %c1_i32_333 : i32
    %c0_334 = arith.constant 0 : index
    %361 = arith.index_cast %360 : i32 to index
    %c0_335 = arith.constant 0 : index
    %c1_336 = arith.constant 1 : index
    %362 = vector.load %arg2[%c0_334, %361, %c0_335, %c1_336] : memref<1x20x8x256xbf16, #tpu.memory_space<vmem>>, vector<1x1x8x128xbf16>
    %363 = vector.shape_cast %362 : vector<1x1x8x128xbf16> to vector<8x128xbf16>
    %c2_i32_337 = arith.constant 2 : i32
    %364 = arith.addi %347, %c2_i32_337 : i32
    %c0_338 = arith.constant 0 : index
    %365 = arith.index_cast %364 : i32 to index
    %c0_339 = arith.constant 0 : index
    %c0_340 = arith.constant 0 : index
    %366 = vector.load %arg2[%c0_338, %365, %c0_339, %c0_340] : memref<1x20x8x256xbf16, #tpu.memory_space<vmem>>, vector<1x1x8x128xbf16>
    %367 = vector.shape_cast %366 : vector<1x1x8x128xbf16> to vector<8x128xbf16>
    %c2_i32_341 = arith.constant 2 : i32
    %368 = arith.addi %347, %c2_i32_341 : i32
    %c0_342 = arith.constant 0 : index
    %369 = arith.index_cast %368 : i32 to index
    %c0_343 = arith.constant 0 : index
    %c1_344 = arith.constant 1 : index
    %370 = vector.load %arg2[%c0_342, %369, %c0_343, %c1_344] : memref<1x20x8x256xbf16, #tpu.memory_space<vmem>>, vector<1x1x8x128xbf16>
    %371 = vector.shape_cast %370 : vector<1x1x8x128xbf16> to vector<8x128xbf16>
    %c3_i32_345 = arith.constant 3 : i32
    %372 = arith.addi %347, %c3_i32_345 : i32
    %c0_346 = arith.constant 0 : index
    %373 = arith.index_cast %372 : i32 to index
    %c0_347 = arith.constant 0 : index
    %c0_348 = arith.constant 0 : index
    %374 = vector.load %arg2[%c0_346, %373, %c0_347, %c0_348] : memref<1x20x8x256xbf16, #tpu.memory_space<vmem>>, vector<1x1x8x128xbf16>
    %375 = vector.shape_cast %374 : vector<1x1x8x128xbf16> to vector<8x128xbf16>
    %c3_i32_349 = arith.constant 3 : i32
    %376 = arith.addi %347, %c3_i32_349 : i32
    %c0_350 = arith.constant 0 : index
    %377 = arith.index_cast %376 : i32 to index
    %c0_351 = arith.constant 0 : index
    %c1_352 = arith.constant 1 : index
    %378 = vector.load %arg2[%c0_350, %377, %c0_351, %c1_352] : memref<1x20x8x256xbf16, #tpu.memory_space<vmem>>, vector<1x1x8x128xbf16>
    %379 = vector.shape_cast %378 : vector<1x1x8x128xbf16> to vector<8x128xbf16>
    %c4_i32_353 = arith.constant 4 : i32
    %380 = arith.addi %347, %c4_i32_353 : i32
    %c0_354 = arith.constant 0 : index
    %381 = arith.index_cast %380 : i32 to index
    %c0_355 = arith.constant 0 : index
    %c0_356 = arith.constant 0 : index
    %382 = vector.load %arg2[%c0_354, %381, %c0_355, %c0_356] : memref<1x20x8x256xbf16, #tpu.memory_space<vmem>>, vector<1x1x8x128xbf16>
    %383 = vector.shape_cast %382 : vector<1x1x8x128xbf16> to vector<8x128xbf16>
    %c4_i32_357 = arith.constant 4 : i32
    %384 = arith.addi %347, %c4_i32_357 : i32
    %c0_358 = arith.constant 0 : index
    %385 = arith.index_cast %384 : i32 to index
    %c0_359 = arith.constant 0 : index
    %c1_360 = arith.constant 1 : index
    %386 = vector.load %arg2[%c0_358, %385, %c0_359, %c1_360] : memref<1x20x8x256xbf16, #tpu.memory_space<vmem>>, vector<1x1x8x128xbf16>
    %387 = vector.shape_cast %386 : vector<1x1x8x128xbf16> to vector<8x128xbf16>
    %388 = tpu.concatenate %351, %355, %359, %363, %367, %371, %375, %379, %383, %387 in 0 : vector<8x128xbf16>, vector<8x128xbf16>, vector<8x128xbf16>, vector<8x128xbf16>, vector<8x128xbf16>, vector<8x128xbf16>, vector<8x128xbf16>, vector<8x128xbf16>, vector<8x128xbf16>, vector<8x128xbf16> -> vector<80x128xbf16>
    %c0_361 = arith.constant 0 : index
    %c0_362 = arith.constant 0 : index
    %389 = vector.load %arg3[%c0_361, %c0_362] : memref<16x80xbf16, #tpu.memory_space<vmem>>, vector<16x80xbf16>
    %cst_363 = arith.constant dense<0.000000e+00> : vector<16x128xf32>
    %390 = tpu.matmul %389, %388, %cst_363 {dimension_numbers = #tpu.dot_dimension_numbers<[1], [0], [0], [1], [0, 0, 1, 1], [], []>} : vector<16x80xbf16>, vector<80x128xbf16>, vector<16x128xf32> -> vector<16x128xf32>
    %391 = arith.addf %2, %390 : vector<16x128xf32>
    %392 = arith.truncf %391 : vector<16x128xf32> to vector<16x128xbf16>
    %c0_364 = arith.constant 0 : index
    %c7 = arith.constant 7 : index
    %c0_365 = arith.constant 0 : index
    %c0_366 = arith.constant 0 : index
    %393 = vector.load %arg5[%c0_364, %c7, %c0_365, %c0_366] : memref<1x8x16x128xbf16, #tpu.memory_space<vmem>>, vector<1x1x16x128xbf16>
    %394 = vector.shape_cast %393 : vector<1x1x16x128xbf16> to vector<16x128xbf16>
    %395 = vector.shape_cast %392 : vector<16x128xbf16> to vector<1x1x16x128xbf16>
    tpu.vector_store %arg5[%c0_364, %c7, %c0_365, %c0_366], %395 {strides = array<i32>} : memref<1x8x16x128xbf16, #tpu.memory_space<vmem>>, vector<1x1x16x128xbf16>,
    return
  }
  func.func @transform_0(%arg0: i32, %arg1: i32) -> (i32, i32, i32, i32) {
    %c0_i32 = arith.constant 0 : i32
    %c0_i32_0 = arith.constant 0 : i32
    %c0_i32_1 = arith.constant 0 : i32
    %c0_i32_2 = arith.constant 0 : i32
    return %arg0, %c0_i32, %c0_i32_0, %c0_i32_1 : i32, i32, i32, i32
  }
  func.func @transform_1(%arg0: i32, %arg1: i32) -> (i32, i32) {
    %c0_i32 = arith.constant 0 : i32
    %c0_i32_0 = arith.constant 0 : i32
    %c0_i32_1 = arith.constant 0 : i32
    return %c0_i32, %c0_i32_0 : i32, i32
  }
  func.func @transform_2(%arg0: i32, %arg1: i32) -> (i32, i32) {
    %c0_i32 = arith.constant 0 : i32
    %c0_i32_0 = arith.constant 0 : i32
    %c0_i32_1 = arith.constant 0 : i32
    return %c0_i32, %c0_i32_0 : i32, i32
  }
  func.func @transform_3(%arg0: i32, %arg1: i32) -> (i32, i32, i32, i32) {
    %c0_i32 = arith.constant 0 : i32
    %c0_i32_0 = arith.constant 0 : i32
    %c0_i32_1 = arith.constant 0 : i32
    return %arg0, %arg1, %c0_i32, %c0_i32_0 : i32, i32, i32, i32
  }
}

</mosaic_0001>

<llo_original>
// kernel: complex_conv2d.1
$region0: #{complex_conv2d.1}
  #allocation0 [shape = 'u32[]', space=smem, size = 0x4, offset = 0x4, fixed_abs, tag = 'smem constant byte address 0x4 - core index']
  #allocation1 [shape = 'u32[72,128]{1,0:T(1,128)}', space=vmem, size = 0x9000, scoped, tag = 'internal scratch']
  %s0 = inlined_call_operand.vmem [shape: bf16[2,20,8,256], index: 0, kind: input, shape index: {}]
  %s1 = inlined_call_operand.vmem [shape: bf16[16,80], index: 1, kind: input, shape index: {}]
  %s2 = inlined_call_operand.vmem [shape: f32[16,1], index: 2, kind: input, shape index: {}]
  %s3 = inlined_call_operand.vmem [shape: bf16[2,8,16,128], index: 3, kind: output, shape index: {}]
  %s4 = sld [smem:[#allocation0]]
  $region45: #{complex_conv2d.1} parent=0
    _
  %s6 = ssub.s32 1, %s4
  %s7 = scalar_select 0, %s6, %s4
  loop: start=0, step=1, limit=4
  $region2: #{complex_conv2d.1} parent=0 // loop_pre_header
    _
  $region3: #{complex_conv2d.1} parent=0 // loop_header
    %s9 = sphi 0, %s13
    %p10 = scmp.ge.s32.totalorder %s9, 4
    %s16 = sphi 0, %s28
    %s17 = sphi 0, %s24
    %s18 = sphi 0, %s16
    %s19 = sphi 0, %s17
    %s20 = sphi 0, %s18
    %s21 = sphi 0, %s19
    %s31 = sphi 0, %s33
    %s34 = sphi 0, %s31
    %s35 = sphi 0, %s34
    %s51 = sphi 0, %s35
    %s55 = sphi 0, %s55
    %s57 = sphi 0, %s55
    %s58 = sphi 0, %s57
    %s72 = sphi 0, %s58
    %s76 = sphi 0, %s76
    %s78 = sphi 0, %s76
    %s79 = sphi 0, %s78
    %s93 = sphi 0, %s79
    %s101 = sphi 0, %s103
    %s104 = sphi 0, %s101
    %s105 = sphi 0, %s104
    %s121 = sphi 0, %s105
  $region4: #{complex_conv2d.1} parent=0 // loop_header_branch
    %12 = sbr.rel (%p10) target = $region8
  $region5: #{complex_conv2d.1} parent=0 // loop_body
    %s14 = ssub.s32 %s9, 1
    %s15 = ssub.s32 %s9, 2
    %s22 = sadd.s32 1, %s17
    %p23 = scmp.ge.s32.totalorder %s22, 1
    %s24 = scalar_select %p23, 0, %s22
    %s25 = sadd.s32 1, %s16
    %s26 = scalar_select %p23, %s25, %s16
    %p27 = scmp.ge.s32.totalorder %s26, 2
    %s28 = scalar_select %p27, 0, %s26
    %s29 = ssub.s32 %s16, %s28
    %p30 = scmp.eq.s32.totalorder %s29, 0
    %s32 = sadd.s32 %s31, 1
    %s33 = scalar_select %p30, %s31, %s32
    %p36 = pneg %p30
    %p37 = scmp.eq.s32.totalorder %s9, 1
    %p38 = por %p36, %p37
    %p39 = scmp.ne.s32.totalorder %s31, %s34
    %p40 = scmp.eq.s32.totalorder %s9, 0
    %p41 = por %p39, %p40
    %p42 = scmp.ne.s32.totalorder %s31, %s34
    %p43 = scmp.eq.s32.totalorder %s14, 1
    %p44 = por %p42, %p43
    %p45 = scmp.ne.s32.totalorder %s34, %s35
    %p46 = scmp.eq.s32.totalorder %s14, 0
    %p47 = por %p45, %p46
    %p48 = scmp.ne.s32.totalorder %s34, %s35
    %p49 = scmp.eq.s32.totalorder %s15, 1
    %p50 = por %p48, %p49
    %p52 = scmp.ne.s32.totalorder %s35, %s51
    %p53 = scmp.eq.s32.totalorder %s15, 0
    %p54 = por %p52, %p53
    %s56 = sadd.s32 %s55, 1
    %p59 = scmp.eq.s32.totalorder %s9, 1
    %p60 = scmp.ne.s32.totalorder %s55, %s57
    %p61 = scmp.eq.s32.totalorder %s9, 0
    %p62 = por %p60, %p61
    %p63 = scmp.ne.s32.totalorder %s55, %s57
    %p64 = scmp.eq.s32.totalorder %s14, 1
    %p65 = por %p63, %p64
    %p66 = scmp.ne.s32.totalorder %s57, %s58
    %p67 = scmp.eq.s32.totalorder %s14, 0
    %p68 = por %p66, %p67
    %p69 = scmp.ne.s32.totalorder %s57, %s58
    %p70 = scmp.eq.s32.totalorder %s15, 1
    %p71 = por %p69, %p70
    %p73 = scmp.ne.s32.totalorder %s58, %s72
    %p74 = scmp.eq.s32.totalorder %s15, 0
    %p75 = por %p73, %p74
    %s77 = sadd.s32 %s76, 1
    %p80 = scmp.eq.s32.totalorder %s9, 1
    %p81 = scmp.ne.s32.totalorder %s76, %s78
    %p82 = scmp.eq.s32.totalorder %s9, 0
    %p83 = por %p81, %p82
    %p84 = scmp.ne.s32.totalorder %s76, %s78
    %p85 = scmp.eq.s32.totalorder %s14, 1
    %p86 = por %p84, %p85
    %p87 = scmp.ne.s32.totalorder %s78, %s79
    %p88 = scmp.eq.s32.totalorder %s14, 0
    %p89 = por %p87, %p88
    %p90 = scmp.ne.s32.totalorder %s78, %s79
    %p91 = scmp.eq.s32.totalorder %s15, 1
    %p92 = por %p90, %p91
    %p94 = scmp.ne.s32.totalorder %s79, %s93
    %p95 = scmp.eq.s32.totalorder %s15, 0
    %p96 = por %p94, %p95
    %s97 = ssub.s32 %s16, %s28
    %s98 = ssub.s32 %s17, %s24
    %s99 = sor.u32 %s97, %s98
    %p100 = scmp.eq.s32.totalorder %s99, 0
    %s102 = sadd.s32 %s101, 1
    %s103 = scalar_select %p100, %s101, %s102
    %p106 = pneg %p100
    %p107 = scmp.eq.s32.totalorder %s9, 1
    %p108 = por %p106, %p107
    %p109 = scmp.ne.s32.totalorder %s101, %s104
    %p110 = scmp.eq.s32.totalorder %s9, 0
    %p111 = por %p109, %p110
    %p112 = scmp.ne.s32.totalorder %s101, %s104
    %p113 = scmp.eq.s32.totalorder %s14, 1
    %p114 = por %p112, %p113
    %p115 = scmp.ne.s32.totalorder %s104, %s105
    %p116 = scmp.eq.s32.totalorder %s14, 0
    %p117 = por %p115, %p116
    %p118 = scmp.ne.s32.totalorder %s104, %s105
    %p119 = scmp.eq.s32.totalorder %s15, 1
    %p120 = por %p118, %p119
    %p122 = scmp.ne.s32.totalorder %s105, %s121
    %p123 = scmp.eq.s32.totalorder %s15, 0
    %p124 = por %p122, %p123
    %p125 = scmp.le.s32.totalorder 1, %s9
    %p126 = scmp.lt.s32.totalorder %s9, 3
    %p127 = pnand %p125, %p126
    %p128 = pneg %p127
    // Predicated region
    $region9: #{complex_conv2d.1} parent=5 // pred_check
      _
    $region10: #{complex_conv2d.1} parent=5 // pred_check_branch
      %130 = sbr.rel (%p127) target = $region12
    $region11: #{complex_conv2d.1} parent=5 // pred_region
      %s131 = ssub.s32 %s9, 1
      // Predicated region
      $region13: #{complex_conv2d.1} parent=11 // pred_check
        %p132 = pneg %p68
      $region14: #{complex_conv2d.1} parent=11 // pred_check_branch
        %134 = sbr.rel (%p132) target = $region16
      $region15: #{complex_conv2d.1} parent=11 // pred_region
        _
      $region16: #{complex_conv2d.1} parent=11 // pred_fallthru
        _
      // Predicated region
      $region17: #{complex_conv2d.1} parent=11 // pred_check
        %p135 = pneg %p89
      $region18: #{complex_conv2d.1} parent=11 // pred_check_branch
        %137 = sbr.rel (%p135) target = $region20
      $region19: #{complex_conv2d.1} parent=11 // pred_region
        _
      $region20: #{complex_conv2d.1} parent=11 // pred_fallthru
        _
    $region12: #{complex_conv2d.1} parent=5 // pred_fallthru
      _
    %p138 = scmp.lt.s32.totalorder %s9, 2
    // Predicated region
    $region21: #{complex_conv2d.1} parent=5 // pred_check
      %p139 = pneg %p138
    $region22: #{complex_conv2d.1} parent=5 // pred_check_branch
      %141 = sbr.rel (%p139) target = $region24
    $region23: #{complex_conv2d.1} parent=5 // pred_region
      // Predicated region
      $region25: #{complex_conv2d.1} parent=23 // pred_check
        %p142 = pneg %p41
      $region26: #{complex_conv2d.1} parent=23 // pred_check_branch
        %144 = sbr.rel (%p142) target = $region28
      $region27: #{complex_conv2d.1} parent=23 // pred_region
        %p145 = scmp.lt.s32.totalorder %s16, 1
        %s146 = scalar_select %p145, %s16, 1
        %s147 = smul.addr %s146, 40
        %s148 = smul.addr %s147, 4
        %s149 = scalar_lea.vmem %s0, %s148
      $region28: #{complex_conv2d.1} parent=23 // pred_fallthru
        _
    $region24: #{complex_conv2d.1} parent=5 // pred_fallthru
      _
    %p150 = scmp.le.s32.totalorder 1, %s9
    %p151 = scmp.lt.s32.totalorder %s9, 3
    %p152 = pnand %p150, %p151
    %p153 = pneg %p152
    // Predicated region
    $region29: #{complex_conv2d.1} parent=5 // pred_check
      _
    $region30: #{complex_conv2d.1} parent=5 // pred_check_branch
      %155 = sbr.rel (%p152) target = $region32
    $region31: #{complex_conv2d.1} parent=5 // pred_region
      %s156 = ssub.s32 %s9, 1
      %p157 = scmp.lt.s32.totalorder %s18, 1
      %s158 = scalar_select %p157, %s18, 1
      %s159 = smul.addr %s158, 40
      %s160 = smul.addr %s159, 4
      %s161 = scalar_lea.vmem %s0, %s160
      %p162 = pneg %p47
      %p163 = pneg %p44
      %p164 = pneg %p68
      %p165 = pneg %p65
      %p166 = pneg %p89
      %p167 = pneg %p86
      %p168 = pneg %p117
      %p169 = pneg %p114
      %s170 = smul.u32 8, %s19
      %p171 = scmp.lt.s32.totalorder %s18, 1
      %s172 = scalar_select %p171, %s18, 1
      %p173 = scmp.lt.s32.totalorder %s170, 7
      %s174 = scalar_select %p173, %s170, 7
      %s175 = smul.addr %s174, 2
      %s176 = smul.addr %s172, 16
      %s177 = sadd.s32 %s175, %s176
      %s178 = smul.addr %s177, 4
      %s179 = scalar_lea.vmem %s3, %s178
      %p180 = scmp.lt.s32.totalorder %s18, 1
      %s181 = scalar_select %p180, %s18, 1
      %s182 = smul.addr %s181, 40
      %s183 = smul.addr %s182, 4
      %s184 = scalar_lea.vmem %s0, %s183
      %s185 = smul.u32 8, %s19
      %p186 = scmp.lt.s32.totalorder %s18, 1
      %s187 = scalar_select %p186, %s18, 1
      %p188 = scmp.lt.s32.totalorder %s185, 7
      %s189 = scalar_select %p188, %s185, 7
      %s190 = smul.addr %s189, 2
      %s191 = smul.addr %s187, 16
      %s192 = sadd.s32 %s190, %s191
      %s193 = smul.addr %s192, 4
      %s194 = scalar_lea.vmem %s3, %s193
      %s195 = smul.u32 8, %s19
      %v197 = vld [vmem:[%s2] sm:$0xff]
      %v198 = vld [vmem:[%s2 + $0x8] sm:$0xff]
      %200 = vset.pattern.permute.xlu0 0
      %201 = vperm.xlu0 %200, %v197
      %v202 = vpop.permute.xlu0 %201
      %205 = vset.pattern.permute.xlu0 0
      %206 = vperm.xlu0 %205, %v198
      %v207 = vpop.permute.xlu0 %206
      %s209 = smul.u32 %s19, 16
      %s210 = smul.u32 %s209, 2
      %s211 = smul.addr %s210, 4
      %s212 = scalar_lea.vmem %s184, %s211
      %v213 = vld [vmem:[%s212] sm:$0xf]
      %v214 = vld [vmem:[%s212] sm:$0xff]
      %s215 = sadd.s32 %s209, 1
      %s216 = smul.u32 %s215, 2
      %s217 = smul.addr %s216, 4
      %s218 = scalar_lea.vmem %s184, %s217
      %v219 = vld [vmem:[%s218] sm:$0xf]
      %v220 = vld [vmem:[%s218] sm:$0xff]
      %s221 = sadd.s32 %s209, 2
      %s222 = smul.u32 %s221, 2
      %s223 = smul.addr %s222, 4
      %s224 = scalar_lea.vmem %s184, %s223
      %v225 = vld [vmem:[%s224] sm:$0xf]
      %v226 = vld [vmem:[%s224] sm:$0xff]
      %s227 = sadd.s32 %s209, 3
      %s228 = smul.u32 %s227, 2
      %s229 = smul.addr %s228, 4
      %s230 = scalar_lea.vmem %s184, %s229
      %v231 = vld [vmem:[%s230] sm:$0xf]
      %v232 = vld [vmem:[%s230] sm:$0xff]
      %s233 = sadd.s32 %s209, 4
      %s234 = smul.u32 %s233, 2
      %s235 = smul.addr %s234, 4
      %s236 = scalar_lea.vmem %s184, %s235
      %v237 = vld [vmem:[%s236] sm:$0xf]
      %v238 = vld [vmem:[%s236] sm:$0xff]
      %v240 = vunpack.c.l.b16 %v214
      %v241 = vunpack.c.h.b16 %v214
      %v242 = vpack.c.b16 %v240, %v240
      %v243 = vpack.c.b16 %v241, %v241
      %244 = vrot.lane.b32.xlu0 %v242, 127
      %v245 = vpop.permute.xlu0 %244
      %246 = vrot.lane.b32.xlu0 %v243, 127
      %v247 = vpop.permute.xlu0 %246
      %vm248 = vcmask 1039360
      %v249 = vsel %vm248, %v245, %v247
      %v251 = vunpack.c.l.b16 %v220
      %v252 = vunpack.c.h.b16 %v220
      %v253 = vpack.c.b16 %v251, %v251
      %v254 = vpack.c.b16 %v252, %v252
      %255 = vrot.lane.b32.xlu0 %v253, 127
      %v256 = vpop.permute.xlu0 %255
      %257 = vrot.lane.b32.xlu0 %v254, 127
      %v258 = vpop.permute.xlu0 %257
      %v259 = vsel %vm248, %v256, %v258
      %v261 = vunpack.c.l.b16 %v226
      %v262 = vunpack.c.h.b16 %v226
      %v263 = vpack.c.b16 %v261, %v261
      %v264 = vpack.c.b16 %v262, %v262
      %265 = vrot.lane.b32.xlu0 %v263, 127
      %v266 = vpop.permute.xlu0 %265
      %267 = vrot.lane.b32.xlu0 %v264, 127
      %v268 = vpop.permute.xlu0 %267
      %v269 = vsel %vm248, %v266, %v268
      %v271 = vunpack.c.l.b16 %v232
      %v272 = vunpack.c.h.b16 %v232
      %v273 = vpack.c.b16 %v271, %v271
      %v274 = vpack.c.b16 %v272, %v272
      %275 = vrot.lane.b32.xlu0 %v273, 127
      %v276 = vpop.permute.xlu0 %275
      %277 = vrot.lane.b32.xlu0 %v274, 127
      %v278 = vpop.permute.xlu0 %277
      %v279 = vsel %vm248, %v276, %v278
      %v281 = vunpack.c.l.b16 %v238
      %v282 = vunpack.c.h.b16 %v238
      %v283 = vpack.c.b16 %v281, %v281
      %v284 = vpack.c.b16 %v282, %v282
      %285 = vrot.lane.b32.xlu0 %v283, 127
      %v286 = vpop.permute.xlu0 %285
      %287 = vrot.lane.b32.xlu0 %v284, 127
      %v288 = vpop.permute.xlu0 %287
      %v289 = vsel %vm248, %v286, %v288
      %vm290 = vcmask 1043456
      %v293 = vsel %vm290, %v213, %v249
      %v297 = vsel %vm290, %v219, %v259
      %v301 = vsel %vm290, %v225, %v269
      %v305 = vsel %vm290, %v231, %v279
      %v309 = vsel %vm290, %v237, %v289
      %v311 = vld [vmem:[%s1] sm:$0xf]
      %v312 = vld [vmem:[%s1 + $0x4] sm:$0xf]
      %v315 = vunpack.c.l.b16 %v311
      %v316 = vunpack.c.l.b16 %v312
      %v317 = vpack.c.b16 %v316, %v315
      %vm318 = vcmask 654336
      %v320 = vsel %vm318, %v317, 0
      %322 = vmatpush.bf16.msra.mxu0 0
      %323 = vmatpush.bf16.msra.mxu0 0
      %324 = vmatpush.bf16.msra.mxu0 0
      %325 = vmatpush.bf16.msra.mxu0 %v309
      %326 = vmatpush.bf16.msra.mxu0 %v305
      %327 = vmatpush.bf16.msra.mxu0 %v301
      %328 = vmatpush.bf16.msra.mxu0 %v297
      %329 = vmatpush.bf16.msra.mxu0 %v293
      %330 = vmatmul.bf16.gmra.mxu0 %v320
      %v331 = vpop.f32.mrf.mxu0
      %v332 = vadd.f32 0.0, %v331
      %v333 = vpop.f32.mrf.mxu0
      %v334 = vadd.f32 0.0, %v333
      %335 = vdwg.mxu0
      %v336 = vadd.f32 %v202, %v332
      %v337 = vadd.f32 %v207, %v334
      %v338 = vpack.c.bf16 %v336, %v336
      %v339 = vpack.c.bf16 %v337, %v337
      %340 = vst [vmem:[%s194] sm:$0xf] %v338
      %341 = vst [vmem:[%s194 + $0x4] sm:$0xf] %v339
      %v342 = vld [vmem:[%s224] sm:$0xf]
      %v343 = vld [vmem:[%s224] sm:$0xff]
      %v344 = vld [vmem:[%s230] sm:$0xf]
      %v345 = vld [vmem:[%s230] sm:$0xff]
      %v346 = vld [vmem:[%s236] sm:$0xf]
      %v347 = vld [vmem:[%s236] sm:$0xff]
      %s348 = sadd.s32 %s209, 5
      %s349 = smul.u32 %s348, 2
      %s350 = smul.addr %s349, 4
      %s351 = scalar_lea.vmem %s184, %s350
      %v352 = vld [vmem:[%s351] sm:$0xf]
      %v353 = vld [vmem:[%s351] sm:$0xff]
      %s354 = sadd.s32 %s209, 6
      %s355 = smul.u32 %s354, 2
      %s356 = smul.addr %s355, 4
      %s357 = scalar_lea.vmem %s184, %s356
      %v358 = vld [vmem:[%s357] sm:$0xf]
      %v359 = vld [vmem:[%s357] sm:$0xff]
      %v361 = vunpack.c.l.b16 %v343
      %v362 = vunpack.c.h.b16 %v343
      %v363 = vpack.c.b16 %v361, %v361
      %v364 = vpack.c.b16 %v362, %v362
      %365 = vrot.lane.b32.xlu0 %v363, 127
      %v366 = vpop.permute.xlu0 %365
      %367 = vrot.lane.b32.xlu0 %v364, 127
      %v368 = vpop.permute.xlu0 %367
      %v369 = vsel %vm248, %v366, %v368
      %v371 = vunpack.c.l.b16 %v345
      %v372 = vunpack.c.h.b16 %v345
      %v373 = vpack.c.b16 %v371, %v371
      %v374 = vpack.c.b16 %v372, %v372
      %375 = vrot.lane.b32.xlu0 %v373, 127
      %v376 = vpop.permute.xlu0 %375
      %377 = vrot.lane.b32.xlu0 %v374, 127
      %v378 = vpop.permute.xlu0 %377
      %v379 = vsel %vm248, %v376, %v378
      %v381 = vunpack.c.l.b16 %v347
      %v382 = vunpack.c.h.b16 %v347
      %v383 = vpack.c.b16 %v381, %v381
      %v384 = vpack.c.b16 %v382, %v382
      %385 = vrot.lane.b32.xlu0 %v383, 127
      %v386 = vpop.permute.xlu0 %385
      %387 = vrot.lane.b32.xlu0 %v384, 127
      %v388 = vpop.permute.xlu0 %387
      %v389 = vsel %vm248, %v386, %v388
      %v391 = vunpack.c.l.b16 %v353
      %v392 = vunpack.c.h.b16 %v353
      %v393 = vpack.c.b16 %v391, %v391
      %v394 = vpack.c.b16 %v392, %v392
      %395 = vrot.lane.b32.xlu0 %v393, 127
      %v396 = vpop.permute.xlu0 %395
      %397 = vrot.lane.b32.xlu0 %v394, 127
      %v398 = vpop.permute.xlu0 %397
      %v399 = vsel %vm248, %v396, %v398
      %v401 = vunpack.c.l.b16 %v359
      %v402 = vunpack.c.h.b16 %v359
      %v403 = vpack.c.b16 %v401, %v401
      %v404 = vpack.c.b16 %v402, %v402
      %405 = vrot.lane.b32.xlu0 %v403, 127
      %v406 = vpop.permute.xlu0 %405
      %407 = vrot.lane.b32.xlu0 %v404, 127
      %v408 = vpop.permute.xlu0 %407
      %v409 = vsel %vm248, %v406, %v408
      %v412 = vsel %vm290, %v342, %v369
      %v416 = vsel %vm290, %v344, %v379
      %v420 = vsel %vm290, %v346, %v389
      %v424 = vsel %vm290, %v352, %v399
      %v428 = vsel %vm290, %v358, %v409
      %v430 = vld [vmem:[%s1] sm:$0xf]
      %v431 = vld [vmem:[%s1 + $0x4] sm:$0xf]
      %v434 = vunpack.c.l.b16 %v430
      %v435 = vunpack.c.l.b16 %v431
      %v436 = vpack.c.b16 %v435, %v434
      %v438 = vsel %vm318, %v436, 0
      %440 = vmatpush.bf16.msra.mxu0 0
      %441 = vmatpush.bf16.msra.mxu0 0
      %442 = vmatpush.bf16.msra.mxu0 0
      %443 = vmatpush.bf16.msra.mxu0 %v428
      %444 = vmatpush.bf16.msra.mxu0 %v424
      %445 = vmatpush.bf16.msra.mxu0 %v420
      %446 = vmatpush.bf16.msra.mxu0 %v416
      %447 = vmatpush.bf16.msra.mxu0 %v412
      %448 = vmatmul.bf16.gmra.mxu0 %v438
      %v449 = vpop.f32.mrf.mxu0
      %v450 = vadd.f32 0.0, %v449
      %v451 = vpop.f32.mrf.mxu0
      %v452 = vadd.f32 0.0, %v451
      %453 = vdwg.mxu0
      %v454 = vadd.f32 %v202, %v450
      %v455 = vadd.f32 %v207, %v452
      %v456 = vpack.c.bf16 %v454, %v454
      %v457 = vpack.c.bf16 %v455, %v455
      %s458 = scalar_lea.vmem %s194, 8
      %459 = vst [vmem:[%s458] sm:$0xf] %v456
      %460 = vst [vmem:[%s458 + $0x4] sm:$0xf] %v457
      %v461 = vld [vmem:[%s236] sm:$0xf]
      %v462 = vld [vmem:[%s236] sm:$0xff]
      %v463 = vld [vmem:[%s351] sm:$0xf]
      %v464 = vld [vmem:[%s351] sm:$0xff]
      %v465 = vld [vmem:[%s357] sm:$0xf]
      %v466 = vld [vmem:[%s357] sm:$0xff]
      %s467 = sadd.s32 %s209, 7
      %s468 = smul.u32 %s467, 2
      %s469 = smul.addr %s468, 4
      %s470 = scalar_lea.vmem %s184, %s469
      %v471 = vld [vmem:[%s470] sm:$0xf]
      %v472 = vld [vmem:[%s470] sm:$0xff]
      %s473 = sadd.s32 %s209, 8
      %s474 = smul.u32 %s473, 2
      %s475 = smul.addr %s474, 4
      %s476 = scalar_lea.vmem %s184, %s475
      %v477 = vld [vmem:[%s476] sm:$0xf]
      %v478 = vld [vmem:[%s476] sm:$0xff]
      %v480 = vunpack.c.l.b16 %v462
      %v481 = vunpack.c.h.b16 %v462
      %v482 = vpack.c.b16 %v480, %v480
      %v483 = vpack.c.b16 %v481, %v481
      %484 = vrot.lane.b32.xlu0 %v482, 127
      %v485 = vpop.permute.xlu0 %484
      %486 = vrot.lane.b32.xlu0 %v483, 127
      %v487 = vpop.permute.xlu0 %486
      %v488 = vsel %vm248, %v485, %v487
      %v490 = vunpack.c.l.b16 %v464
      %v491 = vunpack.c.h.b16 %v464
      %v492 = vpack.c.b16 %v490, %v490
      %v493 = vpack.c.b16 %v491, %v491
      %494 = vrot.lane.b32.xlu0 %v492, 127
      %v495 = vpop.permute.xlu0 %494
      %496 = vrot.lane.b32.xlu0 %v493, 127
      %v497 = vpop.permute.xlu0 %496
      %v498 = vsel %vm248, %v495, %v497
      %v500 = vunpack.c.l.b16 %v466
      %v501 = vunpack.c.h.b16 %v466
      %v502 = vpack.c.b16 %v500, %v500
      %v503 = vpack.c.b16 %v501, %v501
      %504 = vrot.lane.b32.xlu0 %v502, 127
      %v505 = vpop.permute.xlu0 %504
      %506 = vrot.lane.b32.xlu0 %v503, 127
      %v507 = vpop.permute.xlu0 %506
      %v508 = vsel %vm248, %v505, %v507
      %v510 = vunpack.c.l.b16 %v472
      %v511 = vunpack.c.h.b16 %v472
      %v512 = vpack.c.b16 %v510, %v510
      %v513 = vpack.c.b16 %v511, %v511
      %514 = vrot.lane.b32.xlu0 %v512, 127
      %v515 = vpop.permute.xlu0 %514
      %516 = vrot.lane.b32.xlu0 %v513, 127
      %v517 = vpop.permute.xlu0 %516
      %v518 = vsel %vm248, %v515, %v517
      %v520 = vunpack.c.l.b16 %v478
      %v521 = vunpack.c.h.b16 %v478
      %v522 = vpack.c.b16 %v520, %v520
      %v523 = vpack.c.b16 %v521, %v521
      %524 = vrot.lane.b32.xlu0 %v522, 127
      %v525 = vpop.permute.xlu0 %524
      %526 = vrot.lane.b32.xlu0 %v523, 127
      %v527 = vpop.permute.xlu0 %526
      %v528 = vsel %vm248, %v525, %v527
      %v531 = vsel %vm290, %v461, %v488
      %v535 = vsel %vm290, %v463, %v498
      %v539 = vsel %vm290, %v465, %v508
      %v543 = vsel %vm290, %v471, %v518
      %v547 = vsel %vm290, %v477, %v528
      %v549 = vld [vmem:[%s1] sm:$0xf]
      %v550 = vld [vmem:[%s1 + $0x4] sm:$0xf]
      %v553 = vunpack.c.l.b16 %v549
      %v554 = vunpack.c.l.b16 %v550
      %v555 = vpack.c.b16 %v554, %v553
      %v557 = vsel %vm318, %v555, 0
      %559 = vmatpush.bf16.msra.mxu0 0
      %560 = vmatpush.bf16.msra.mxu0 0
      %561 = vmatpush.bf16.msra.mxu0 0
      %562 = vmatpush.bf16.msra.mxu0 %v547
      %563 = vmatpush.bf16.msra.mxu0 %v543
      %564 = vmatpush.bf16.msra.mxu0 %v539
      %565 = vmatpush.bf16.msra.mxu0 %v535
      %566 = vmatpush.bf16.msra.mxu0 %v531
      %567 = vmatmul.bf16.gmra.mxu0 %v557
      %v568 = vpop.f32.mrf.mxu0
      %v569 = vadd.f32 0.0, %v568
      %v570 = vpop.f32.mrf.mxu0
      %v571 = vadd.f32 0.0, %v570
      %572 = vdwg.mxu0
      %v573 = vadd.f32 %v202, %v569
      %v574 = vadd.f32 %v207, %v571
      %v575 = vpack.c.bf16 %v573, %v573
      %v576 = vpack.c.bf16 %v574, %v574
      %s577 = scalar_lea.vmem %s194, 16
      %578 = vst [vmem:[%s577] sm:$0xf] %v575
      %579 = vst [vmem:[%s577 + $0x4] sm:$0xf] %v576
      %v580 = vld [vmem:[%s357] sm:$0xf]
      %v581 = vld [vmem:[%s357] sm:$0xff]
      %v582 = vld [vmem:[%s470] sm:$0xf]
      %v583 = vld [vmem:[%s470] sm:$0xff]
      %v584 = vld [vmem:[%s476] sm:$0xf]
      %v585 = vld [vmem:[%s476] sm:$0xff]
      %s586 = sadd.s32 %s209, 9
      %s587 = smul.u32 %s586, 2
      %s588 = smul.addr %s587, 4
      %s589 = scalar_lea.vmem %s184, %s588
      %v590 = vld [vmem:[%s589] sm:$0xf]
      %v591 = vld [vmem:[%s589] sm:$0xff]
      %s592 = sadd.s32 %s209, 10
      %s593 = smul.u32 %s592, 2
      %s594 = smul.addr %s593, 4
      %s595 = scalar_lea.vmem %s184, %s594
      %v596 = vld [vmem:[%s595] sm:$0xf]
      %v597 = vld [vmem:[%s595] sm:$0xff]
      %v599 = vunpack.c.l.b16 %v581
      %v600 = vunpack.c.h.b16 %v581
      %v601 = vpack.c.b16 %v599, %v599
      %v602 = vpack.c.b16 %v600, %v600
      %603 = vrot.lane.b32.xlu0 %v601, 127
      %v604 = vpop.permute.xlu0 %603
      %605 = vrot.lane.b32.xlu0 %v602, 127
      %v606 = vpop.permute.xlu0 %605
      %v607 = vsel %vm248, %v604, %v606
      %v609 = vunpack.c.l.b16 %v583
      %v610 = vunpack.c.h.b16 %v583
      %v611 = vpack.c.b16 %v609, %v609
      %v612 = vpack.c.b16 %v610, %v610
      %613 = vrot.lane.b32.xlu0 %v611, 127
      %v614 = vpop.permute.xlu0 %613
      %615 = vrot.lane.b32.xlu0 %v612, 127
      %v616 = vpop.permute.xlu0 %615
      %v617 = vsel %vm248, %v614, %v616
      %v619 = vunpack.c.l.b16 %v585
      %v620 = vunpack.c.h.b16 %v585
      %v621 = vpack.c.b16 %v619, %v619
      %v622 = vpack.c.b16 %v620, %v620
      %623 = vrot.lane.b32.xlu0 %v621, 127
      %v624 = vpop.permute.xlu0 %623
      %625 = vrot.lane.b32.xlu0 %v622, 127
      %v626 = vpop.permute.xlu0 %625
      %v627 = vsel %vm248, %v624, %v626
      %v629 = vunpack.c.l.b16 %v591
      %v630 = vunpack.c.h.b16 %v591
      %v631 = vpack.c.b16 %v629, %v629
      %v632 = vpack.c.b16 %v630, %v630
      %633 = vrot.lane.b32.xlu0 %v631, 127
      %v634 = vpop.permute.xlu0 %633
      %635 = vrot.lane.b32.xlu0 %v632, 127
      %v636 = vpop.permute.xlu0 %635
      %v637 = vsel %vm248, %v634, %v636
      %v639 = vunpack.c.l.b16 %v597
      %v640 = vunpack.c.h.b16 %v597
      %v641 = vpack.c.b16 %v639, %v639
      %v642 = vpack.c.b16 %v640, %v640
      %643 = vrot.lane.b32.xlu0 %v641, 127
      %v644 = vpop.permute.xlu0 %643
      %645 = vrot.lane.b32.xlu0 %v642, 127
      %v646 = vpop.permute.xlu0 %645
      %v647 = vsel %vm248, %v644, %v646
      %v650 = vsel %vm290, %v580, %v607
      %v654 = vsel %vm290, %v582, %v617
      %v658 = vsel %vm290, %v584, %v627
      %v662 = vsel %vm290, %v590, %v637
      %v666 = vsel %vm290, %v596, %v647
      %v668 = vld [vmem:[%s1] sm:$0xf]
      %v669 = vld [vmem:[%s1 + $0x4] sm:$0xf]
      %v672 = vunpack.c.l.b16 %v668
      %v673 = vunpack.c.l.b16 %v669
      %v674 = vpack.c.b16 %v673, %v672
      %v676 = vsel %vm318, %v674, 0
      %678 = vmatpush.bf16.msra.mxu0 0
      %679 = vmatpush.bf16.msra.mxu0 0
      %680 = vmatpush.bf16.msra.mxu0 0
      %681 = vmatpush.bf16.msra.mxu0 %v666
      %682 = vmatpush.bf16.msra.mxu0 %v662
      %683 = vmatpush.bf16.msra.mxu0 %v658
      %684 = vmatpush.bf16.msra.mxu0 %v654
      %685 = vmatpush.bf16.msra.mxu0 %v650
      %686 = vmatmul.bf16.gmra.mxu0 %v676
      %v687 = vpop.f32.mrf.mxu0
      %v688 = vadd.f32 0.0, %v687
      %v689 = vpop.f32.mrf.mxu0
      %v690 = vadd.f32 0.0, %v689
      %691 = vdwg.mxu0
      %v692 = vadd.f32 %v202, %v688
      %v693 = vadd.f32 %v207, %v690
      %v694 = vpack.c.bf16 %v692, %v692
      %v695 = vpack.c.bf16 %v693, %v693
      %s696 = scalar_lea.vmem %s194, 24
      %697 = vst [vmem:[%s696] sm:$0xf] %v694
      %698 = vst [vmem:[%s696 + $0x4] sm:$0xf] %v695
      %v699 = vld [vmem:[%s476] sm:$0xf]
      %v700 = vld [vmem:[%s476] sm:$0xff]
      %v701 = vld [vmem:[%s589] sm:$0xf]
      %v702 = vld [vmem:[%s589] sm:$0xff]
      %v703 = vld [vmem:[%s595] sm:$0xf]
      %v704 = vld [vmem:[%s595] sm:$0xff]
      %s705 = sadd.s32 %s209, 11
      %s706 = smul.u32 %s705, 2
      %s707 = smul.addr %s706, 4
      %s708 = scalar_lea.vmem %s184, %s707
      %v709 = vld [vmem:[%s708] sm:$0xf]
      %v710 = vld [vmem:[%s708] sm:$0xff]
      %s711 = sadd.s32 %s209, 12
      %s712 = smul.u32 %s711, 2
      %s713 = smul.addr %s712, 4
      %s714 = scalar_lea.vmem %s184, %s713
      %v715 = vld [vmem:[%s714] sm:$0xf]
      %v716 = vld [vmem:[%s714] sm:$0xff]
      %v718 = vunpack.c.l.b16 %v700
      %v719 = vunpack.c.h.b16 %v700
      %v720 = vpack.c.b16 %v718, %v718
      %v721 = vpack.c.b16 %v719, %v719
      %722 = vrot.lane.b32.xlu0 %v720, 127
      %v723 = vpop.permute.xlu0 %722
      %724 = vrot.lane.b32.xlu0 %v721, 127
      %v725 = vpop.permute.xlu0 %724
      %v726 = vsel %vm248, %v723, %v725
      %v728 = vunpack.c.l.b16 %v702
      %v729 = vunpack.c.h.b16 %v702
      %v730 = vpack.c.b16 %v728, %v728
      %v731 = vpack.c.b16 %v729, %v729
      %732 = vrot.lane.b32.xlu0 %v730, 127
      %v733 = vpop.permute.xlu0 %732
      %734 = vrot.lane.b32.xlu0 %v731, 127
      %v735 = vpop.permute.xlu0 %734
      %v736 = vsel %vm248, %v733, %v735
      %v738 = vunpack.c.l.b16 %v704
      %v739 = vunpack.c.h.b16 %v704
      %v740 = vpack.c.b16 %v738, %v738
      %v741 = vpack.c.b16 %v739, %v739
      %742 = vrot.lane.b32.xlu0 %v740, 127
      %v743 = vpop.permute.xlu0 %742
      %744 = vrot.lane.b32.xlu0 %v741, 127
      %v745 = vpop.permute.xlu0 %744
      %v746 = vsel %vm248, %v743, %v745
      %v748 = vunpack.c.l.b16 %v710
      %v749 = vunpack.c.h.b16 %v710
      %v750 = vpack.c.b16 %v748, %v748
      %v751 = vpack.c.b16 %v749, %v749
      %752 = vrot.lane.b32.xlu0 %v750, 127
      %v753 = vpop.permute.xlu0 %752
      %754 = vrot.lane.b32.xlu0 %v751, 127
      %v755 = vpop.permute.xlu0 %754
      %v756 = vsel %vm248, %v753, %v755
      %v758 = vunpack.c.l.b16 %v716
      %v759 = vunpack.c.h.b16 %v716
      %v760 = vpack.c.b16 %v758, %v758
      %v761 = vpack.c.b16 %v759, %v759
      %762 = vrot.lane.b32.xlu0 %v760, 127
      %v763 = vpop.permute.xlu0 %762
      %764 = vrot.lane.b32.xlu0 %v761, 127
      %v765 = vpop.permute.xlu0 %764
      %v766 = vsel %vm248, %v763, %v765
      %v769 = vsel %vm290, %v699, %v726
      %v773 = vsel %vm290, %v701, %v736
      %v777 = vsel %vm290, %v703, %v746
      %v781 = vsel %vm290, %v709, %v756
      %v785 = vsel %vm290, %v715, %v766
      %v787 = vld [vmem:[%s1] sm:$0xf]
      %v788 = vld [vmem:[%s1 + $0x4] sm:$0xf]
      %v791 = vunpack.c.l.b16 %v787
      %v792 = vunpack.c.l.b16 %v788
      %v793 = vpack.c.b16 %v792, %v791
      %v795 = vsel %vm318, %v793, 0
      %797 = vmatpush.bf16.msra.mxu0 0
      %798 = vmatpush.bf16.msra.mxu0 0
      %799 = vmatpush.bf16.msra.mxu0 0
      %800 = vmatpush.bf16.msra.mxu0 %v785
      %801 = vmatpush.bf16.msra.mxu0 %v781
      %802 = vmatpush.bf16.msra.mxu0 %v777
      %803 = vmatpush.bf16.msra.mxu0 %v773
      %804 = vmatpush.bf16.msra.mxu0 %v769
      %805 = vmatmul.bf16.gmra.mxu0 %v795
      %v806 = vpop.f32.mrf.mxu0
      %v807 = vadd.f32 0.0, %v806
      %v808 = vpop.f32.mrf.mxu0
      %v809 = vadd.f32 0.0, %v808
      %810 = vdwg.mxu0
      %v811 = vadd.f32 %v202, %v807
      %v812 = vadd.f32 %v207, %v809
      %v813 = vpack.c.bf16 %v811, %v811
      %v814 = vpack.c.bf16 %v812, %v812
      %s815 = scalar_lea.vmem %s194, 32
      %816 = vst [vmem:[%s815] sm:$0xf] %v813
      %817 = vst [vmem:[%s815 + $0x4] sm:$0xf] %v814
      %v818 = vld [vmem:[%s595] sm:$0xf]
      %v819 = vld [vmem:[%s595] sm:$0xff]
      %v820 = vld [vmem:[%s708] sm:$0xf]
      %v821 = vld [vmem:[%s708] sm:$0xff]
      %v822 = vld [vmem:[%s714] sm:$0xf]
      %v823 = vld [vmem:[%s714] sm:$0xff]
      %s824 = sadd.s32 %s209, 13
      %s825 = smul.u32 %s824, 2
      %s826 = smul.addr %s825, 4
      %s827 = scalar_lea.vmem %s184, %s826
      %v828 = vld [vmem:[%s827] sm:$0xf]
      %v829 = vld [vmem:[%s827] sm:$0xff]
      %s830 = sadd.s32 %s209, 14
      %s831 = smul.u32 %s830, 2
      %s832 = smul.addr %s831, 4
      %s833 = scalar_lea.vmem %s184, %s832
      %v834 = vld [vmem:[%s833] sm:$0xf]
      %v835 = vld [vmem:[%s833] sm:$0xff]
      %v837 = vunpack.c.l.b16 %v819
      %v838 = vunpack.c.h.b16 %v819
      %v839 = vpack.c.b16 %v837, %v837
      %v840 = vpack.c.b16 %v838, %v838
      %841 = vrot.lane.b32.xlu0 %v839, 127
      %v842 = vpop.permute.xlu0 %841
      %843 = vrot.lane.b32.xlu0 %v840, 127
      %v844 = vpop.permute.xlu0 %843
      %v845 = vsel %vm248, %v842, %v844
      %v847 = vunpack.c.l.b16 %v821
      %v848 = vunpack.c.h.b16 %v821
      %v849 = vpack.c.b16 %v847, %v847
      %v850 = vpack.c.b16 %v848, %v848
      %851 = vrot.lane.b32.xlu0 %v849, 127
      %v852 = vpop.permute.xlu0 %851
      %853 = vrot.lane.b32.xlu0 %v850, 127
      %v854 = vpop.permute.xlu0 %853
      %v855 = vsel %vm248, %v852, %v854
      %v857 = vunpack.c.l.b16 %v823
      %v858 = vunpack.c.h.b16 %v823
      %v859 = vpack.c.b16 %v857, %v857
      %v860 = vpack.c.b16 %v858, %v858
      %861 = vrot.lane.b32.xlu0 %v859, 127
      %v862 = vpop.permute.xlu0 %861
      %863 = vrot.lane.b32.xlu0 %v860, 127
      %v864 = vpop.permute.xlu0 %863
      %v865 = vsel %vm248, %v862, %v864
      %v867 = vunpack.c.l.b16 %v829
      %v868 = vunpack.c.h.b16 %v829
      %v869 = vpack.c.b16 %v867, %v867
      %v870 = vpack.c.b16 %v868, %v868
      %871 = vrot.lane.b32.xlu0 %v869, 127
      %v872 = vpop.permute.xlu0 %871
      %873 = vrot.lane.b32.xlu0 %v870, 127
      %v874 = vpop.permute.xlu0 %873
      %v875 = vsel %vm248, %v872, %v874
      %v877 = vunpack.c.l.b16 %v835
      %v878 = vunpack.c.h.b16 %v835
      %v879 = vpack.c.b16 %v877, %v877
      %v880 = vpack.c.b16 %v878, %v878
      %881 = vrot.lane.b32.xlu0 %v879, 127
      %v882 = vpop.permute.xlu0 %881
      %883 = vrot.lane.b32.xlu0 %v880, 127
      %v884 = vpop.permute.xlu0 %883
      %v885 = vsel %vm248, %v882, %v884
      %v888 = vsel %vm290, %v818, %v845
      %v892 = vsel %vm290, %v820, %v855
      %v896 = vsel %vm290, %v822, %v865
      %v900 = vsel %vm290, %v828, %v875
      %v904 = vsel %vm290, %v834, %v885
      %v906 = vld [vmem:[%s1] sm:$0xf]
      %v907 = vld [vmem:[%s1 + $0x4] sm:$0xf]
      %v910 = vunpack.c.l.b16 %v906
      %v911 = vunpack.c.l.b16 %v907
      %v912 = vpack.c.b16 %v911, %v910
      %v914 = vsel %vm318, %v912, 0
      %916 = vmatpush.bf16.msra.mxu0 0
      %917 = vmatpush.bf16.msra.mxu0 0
      %918 = vmatpush.bf16.msra.mxu0 0
      %919 = vmatpush.bf16.msra.mxu0 %v904
      %920 = vmatpush.bf16.msra.mxu0 %v900
      %921 = vmatpush.bf16.msra.mxu0 %v896
      %922 = vmatpush.bf16.msra.mxu0 %v892
      %923 = vmatpush.bf16.msra.mxu0 %v888
      %924 = vmatmul.bf16.gmra.mxu0 %v914
      %v925 = vpop.f32.mrf.mxu0
      %v926 = vadd.f32 0.0, %v925
      %v927 = vpop.f32.mrf.mxu0
      %v928 = vadd.f32 0.0, %v927
      %929 = vdwg.mxu0
      %v930 = vadd.f32 %v202, %v926
      %v931 = vadd.f32 %v207, %v928
      %v932 = vpack.c.bf16 %v930, %v930
      %v933 = vpack.c.bf16 %v931, %v931
      %s934 = scalar_lea.vmem %s194, 40
      %935 = vst [vmem:[%s934] sm:$0xf] %v932
      %936 = vst [vmem:[%s934 + $0x4] sm:$0xf] %v933
      %v937 = vld [vmem:[%s714] sm:$0xf]
      %v938 = vld [vmem:[%s714] sm:$0xff]
      %v939 = vld [vmem:[%s827] sm:$0xf]
      %v940 = vld [vmem:[%s827] sm:$0xff]
      %v941 = vld [vmem:[%s833] sm:$0xf]
      %v942 = vld [vmem:[%s833] sm:$0xff]
      %s943 = sadd.s32 %s209, 15
      %s944 = smul.u32 %s943, 2
      %s945 = smul.addr %s944, 4
      %s946 = scalar_lea.vmem %s184, %s945
      %v947 = vld [vmem:[%s946] sm:$0xf]
      %v948 = vld [vmem:[%s946] sm:$0xff]
      %s949 = sadd.s32 %s209, 16
      %s950 = smul.u32 %s949, 2
      %s951 = smul.addr %s950, 4
      %s952 = scalar_lea.vmem %s184, %s951
      %v953 = vld [vmem:[%s952] sm:$0xf]
      %v954 = vld [vmem:[%s952] sm:$0xff]
      %v956 = vunpack.c.l.b16 %v938
      %v957 = vunpack.c.h.b16 %v938
      %v958 = vpack.c.b16 %v956, %v956
      %v959 = vpack.c.b16 %v957, %v957
      %960 = vrot.lane.b32.xlu0 %v958, 127
      %v961 = vpop.permute.xlu0 %960
      %962 = vrot.lane.b32.xlu0 %v959, 127
      %v963 = vpop.permute.xlu0 %962
      %v964 = vsel %vm248, %v961, %v963
      %v966 = vunpack.c.l.b16 %v940
      %v967 = vunpack.c.h.b16 %v940
      %v968 = vpack.c.b16 %v966, %v966
      %v969 = vpack.c.b16 %v967, %v967
      %970 = vrot.lane.b32.xlu0 %v968, 127
      %v971 = vpop.permute.xlu0 %970
      %972 = vrot.lane.b32.xlu0 %v969, 127
      %v973 = vpop.permute.xlu0 %972
      %v974 = vsel %vm248, %v971, %v973
      %v976 = vunpack.c.l.b16 %v942
      %v977 = vunpack.c.h.b16 %v942
      %v978 = vpack.c.b16 %v976, %v976
      %v979 = vpack.c.b16 %v977, %v977
      %980 = vrot.lane.b32.xlu0 %v978, 127
      %v981 = vpop.permute.xlu0 %980
      %982 = vrot.lane.b32.xlu0 %v979, 127
      %v983 = vpop.permute.xlu0 %982
      %v984 = vsel %vm248, %v981, %v983
      %v986 = vunpack.c.l.b16 %v948
      %v987 = vunpack.c.h.b16 %v948
      %v988 = vpack.c.b16 %v986, %v986
      %v989 = vpack.c.b16 %v987, %v987
      %990 = vrot.lane.b32.xlu0 %v988, 127
      %v991 = vpop.permute.xlu0 %990
      %992 = vrot.lane.b32.xlu0 %v989, 127
      %v993 = vpop.permute.xlu0 %992
      %v994 = vsel %vm248, %v991, %v993
      %v996 = vunpack.c.l.b16 %v954
      %v997 = vunpack.c.h.b16 %v954
      %v998 = vpack.c.b16 %v996, %v996
      %v999 = vpack.c.b16 %v997, %v997
      %1000 = vrot.lane.b32.xlu0 %v998, 127
      %v1001 = vpop.permute.xlu0 %1000
      %1002 = vrot.lane.b32.xlu0 %v999, 127
      %v1003 = vpop.permute.xlu0 %1002
      %v1004 = vsel %vm248, %v1001, %v1003
      %v1007 = vsel %vm290, %v937, %v964
      %v1011 = vsel %vm290, %v939, %v974
      %v1015 = vsel %vm290, %v941, %v984
      %v1019 = vsel %vm290, %v947, %v994
      %v1023 = vsel %vm290, %v953, %v1004
      %v1025 = vld [vmem:[%s1] sm:$0xf]
      %v1026 = vld [vmem:[%s1 + $0x4] sm:$0xf]
      %v1029 = vunpack.c.l.b16 %v1025
      %v1030 = vunpack.c.l.b16 %v1026
      %v1031 = vpack.c.b16 %v1030, %v1029
      %v1033 = vsel %vm318, %v1031, 0
      %1035 = vmatpush.bf16.msra.mxu0 0
      %1036 = vmatpush.bf16.msra.mxu0 0
      %1037 = vmatpush.bf16.msra.mxu0 0
      %1038 = vmatpush.bf16.msra.mxu0 %v1023
      %1039 = vmatpush.bf16.msra.mxu0 %v1019
      %1040 = vmatpush.bf16.msra.mxu0 %v1015
      %1041 = vmatpush.bf16.msra.mxu0 %v1011
      %1042 = vmatpush.bf16.msra.mxu0 %v1007
      %1043 = vmatmul.bf16.gmra.mxu0 %v1033
      %v1044 = vpop.f32.mrf.mxu0
      %v1045 = vadd.f32 0.0, %v1044
      %v1046 = vpop.f32.mrf.mxu0
      %v1047 = vadd.f32 0.0, %v1046
      %1048 = vdwg.mxu0
      %v1049 = vadd.f32 %v202, %v1045
      %v1050 = vadd.f32 %v207, %v1047
      %v1051 = vpack.c.bf16 %v1049, %v1049
      %v1052 = vpack.c.bf16 %v1050, %v1050
      %s1053 = scalar_lea.vmem %s194, 48
      %1054 = vst [vmem:[%s1053] sm:$0xf] %v1051
      %1055 = vst [vmem:[%s1053 + $0x4] sm:$0xf] %v1052
      %v1056 = vld [vmem:[%s833] sm:$0xf]
      %v1057 = vld [vmem:[%s833] sm:$0xff]
      %v1058 = vld [vmem:[%s946] sm:$0xf]
      %v1059 = vld [vmem:[%s946] sm:$0xff]
      %v1060 = vld [vmem:[%s952] sm:$0xf]
      %v1061 = vld [vmem:[%s952] sm:$0xff]
      %s1062 = sadd.s32 %s209, 17
      %s1063 = smul.u32 %s1062, 2
      %s1064 = smul.addr %s1063, 4
      %s1065 = scalar_lea.vmem %s184, %s1064
      %v1066 = vld [vmem:[%s1065] sm:$0xf]
      %v1067 = vld [vmem:[%s1065] sm:$0xff]
      %s1068 = sadd.s32 %s209, 18
      %s1069 = smul.u32 %s1068, 2
      %s1070 = smul.addr %s1069, 4
      %s1071 = scalar_lea.vmem %s184, %s1070
      %v1072 = vld [vmem:[%s1071] sm:$0xf]
      %v1073 = vld [vmem:[%s1071] sm:$0xff]
      %v1075 = vunpack.c.l.b16 %v1057
      %v1076 = vunpack.c.h.b16 %v1057
      %v1077 = vpack.c.b16 %v1075, %v1075
      %v1078 = vpack.c.b16 %v1076, %v1076
      %1079 = vrot.lane.b32.xlu0 %v1077, 127
      %v1080 = vpop.permute.xlu0 %1079
      %1081 = vrot.lane.b32.xlu0 %v1078, 127
      %v1082 = vpop.permute.xlu0 %1081
      %v1083 = vsel %vm248, %v1080, %v1082
      %v1085 = vunpack.c.l.b16 %v1059
      %v1086 = vunpack.c.h.b16 %v1059
      %v1087 = vpack.c.b16 %v1085, %v1085
      %v1088 = vpack.c.b16 %v1086, %v1086
      %1089 = vrot.lane.b32.xlu0 %v1087, 127
      %v1090 = vpop.permute.xlu0 %1089
      %1091 = vrot.lane.b32.xlu0 %v1088, 127
      %v1092 = vpop.permute.xlu0 %1091
      %v1093 = vsel %vm248, %v1090, %v1092
      %v1095 = vunpack.c.l.b16 %v1061
      %v1096 = vunpack.c.h.b16 %v1061
      %v1097 = vpack.c.b16 %v1095, %v1095
      %v1098 = vpack.c.b16 %v1096, %v1096
      %1099 = vrot.lane.b32.xlu0 %v1097, 127
      %v1100 = vpop.permute.xlu0 %1099
      %1101 = vrot.lane.b32.xlu0 %v1098, 127
      %v1102 = vpop.permute.xlu0 %1101
      %v1103 = vsel %vm248, %v1100, %v1102
      %v1105 = vunpack.c.l.b16 %v1067
      %v1106 = vunpack.c.h.b16 %v1067
      %v1107 = vpack.c.b16 %v1105, %v1105
      %v1108 = vpack.c.b16 %v1106, %v1106
      %1109 = vrot.lane.b32.xlu0 %v1107, 127
      %v1110 = vpop.permute.xlu0 %1109
      %1111 = vrot.lane.b32.xlu0 %v1108, 127
      %v1112 = vpop.permute.xlu0 %1111
      %v1113 = vsel %vm248, %v1110, %v1112
      %v1115 = vunpack.c.l.b16 %v1073
      %v1116 = vunpack.c.h.b16 %v1073
      %v1117 = vpack.c.b16 %v1115, %v1115
      %v1118 = vpack.c.b16 %v1116, %v1116
      %1119 = vrot.lane.b32.xlu0 %v1117, 127
      %v1120 = vpop.permute.xlu0 %1119
      %1121 = vrot.lane.b32.xlu0 %v1118, 127
      %v1122 = vpop.permute.xlu0 %1121
      %v1123 = vsel %vm248, %v1120, %v1122
      %v1126 = vsel %vm290, %v1056, %v1083
      %v1130 = vsel %vm290, %v1058, %v1093
      %v1134 = vsel %vm290, %v1060, %v1103
      %v1138 = vsel %vm290, %v1066, %v1113
      %v1142 = vsel %vm290, %v1072, %v1123
      %v1144 = vld [vmem:[%s1] sm:$0xf]
      %v1145 = vld [vmem:[%s1 + $0x4] sm:$0xf]
      %v1148 = vunpack.c.l.b16 %v1144
      %v1149 = vunpack.c.l.b16 %v1145
      %v1150 = vpack.c.b16 %v1149, %v1148
      %v1152 = vsel %vm318, %v1150, 0
      %1154 = vmatpush.bf16.msra.mxu0 0
      %1155 = vmatpush.bf16.msra.mxu0 0
      %1156 = vmatpush.bf16.msra.mxu0 0
      %1157 = vmatpush.bf16.msra.mxu0 %v1142
      %1158 = vmatpush.bf16.msra.mxu0 %v1138
      %1159 = vmatpush.bf16.msra.mxu0 %v1134
      %1160 = vmatpush.bf16.msra.mxu0 %v1130
      %1161 = vmatpush.bf16.msra.mxu0 %v1126
      %1162 = vmatmul.bf16.gmra.mxu0 %v1152
      %v1163 = vpop.f32.mrf.mxu0
      %v1164 = vadd.f32 0.0, %v1163
      %v1165 = vpop.f32.mrf.mxu0
      %v1166 = vadd.f32 0.0, %v1165
      %1167 = vdwg.mxu0
      %v1168 = vadd.f32 %v202, %v1164
      %v1169 = vadd.f32 %v207, %v1166
      %v1170 = vpack.c.bf16 %v1168, %v1168
      %v1171 = vpack.c.bf16 %v1169, %v1169
      %s1172 = scalar_lea.vmem %s194, 56
      %1173 = vst [vmem:[%s1172] sm:$0xf] %v1170
      %1174 = vst [vmem:[%s1172 + $0x4] sm:$0xf] %v1171
      %s1175 = smul.u32 8, %s19
      %p1176 = scmp.lt.s32.totalorder %s18, 1
      %s1177 = scalar_select %p1176, %s18, 1
      %p1178 = scmp.lt.s32.totalorder %s1175, 7
      %s1179 = scalar_select %p1178, %s1175, 7
      %s1180 = smul.addr %s1179, 2
      %s1181 = smul.addr %s1177, 16
      %s1182 = sadd.s32 %s1180, %s1181
      %s1183 = smul.addr %s1182, 4
      %s1184 = scalar_lea.vmem %s3, %s1183
      // Predicated region
      $region33: #{complex_conv2d.1} parent=31 // pred_check
        %p1185 = pneg %p114
      $region34: #{complex_conv2d.1} parent=31 // pred_check_branch
        %1187 = sbr.rel (%p1185) target = $region36
      $region35: #{complex_conv2d.1} parent=31 // pred_region
        %s1188 = smul.u32 8, %s19
      $region36: #{complex_conv2d.1} parent=31 // pred_fallthru
        _
    $region32: #{complex_conv2d.1} parent=5 // pred_fallthru
      _
    %p1189 = scmp.le.s32.totalorder 2, %s9
    // Predicated region
    $region37: #{complex_conv2d.1} parent=5 // pred_check
      %p1190 = pneg %p1189
    $region38: #{complex_conv2d.1} parent=5 // pred_check_branch
      %1192 = sbr.rel (%p1190) target = $region40
    $region39: #{complex_conv2d.1} parent=5 // pred_region
      %s1193 = ssub.s32 %s9, 2
      // Predicated region
      $region41: #{complex_conv2d.1} parent=39 // pred_check
        %p1194 = pneg %p120
      $region42: #{complex_conv2d.1} parent=39 // pred_check_branch
        %1196 = sbr.rel (%p1194) target = $region44
      $region43: #{complex_conv2d.1} parent=39 // pred_region
        %s1197 = smul.u32 8, %s21
        %p1198 = scmp.lt.s32.totalorder %s20, 1
        %s1199 = scalar_select %p1198, %s20, 1
        %p1200 = scmp.lt.s32.totalorder %s1197, 7
        %s1201 = scalar_select %p1200, %s1197, 7
        %s1202 = smul.addr %s1201, 2
        %s1203 = smul.addr %s1199, 16
        %s1204 = sadd.s32 %s1202, %s1203
        %s1205 = smul.addr %s1204, 4
        %s1206 = scalar_lea.vmem %s3, %s1205
      $region44: #{complex_conv2d.1} parent=39 // pred_fallthru
        _
    $region40: #{complex_conv2d.1} parent=5 // pred_fallthru
      _
  $region6: #{complex_conv2d.1} parent=0 // loop_footer
    %s13 = sadd.s32 1, %s9
  $region7: #{complex_conv2d.1} parent=0 // loop_footer_branch
    %8 = sbr.rel target = $region3
  $region8: #{complex_conv2d.1} parent=0 // loop_exit
    _

</llo_original>
